<compile_context>
chip_gen: v7x
topology: tpu7x:2x2x1
jax: 0.10.0
libtpu: 0.0.40
codegen_flags: <defaults>
</compile_context>

<pallas_src>
import math
import functools

import jax
import jax.numpy as jnp
from jax.experimental import pallas as pl
from jax.experimental.pallas import tpu as pltpu

_LANES = 128
_MAX_BLOCK_ROWS = 2048      # (2048, 128) f32 block = 1 MiB per input per step
_MIN_PALLAS_ELEMS = 16384   # below this, a pallas_call costs more than it saves


# ---------------------------------------------------------------------------
# Static tiling helpers
# ---------------------------------------------------------------------------
def _sublane_multiple(dtype):
    """Sublane granularity for the block's second-minor dim (8 f32 / 16 bf16 / 32 i8)."""
    itemsize = jnp.dtype(dtype).itemsize
    return 8 * max(1, 4 // itemsize)


def _tiling(n, dtype):
    """Static tiling decisions for a flat array of n elements (n >= _MIN_PALLAS_ELEMS)."""
    rows_total = n // _LANES                               # full 128-lane rows
    sub = _sublane_multiple(dtype)
    bm = min(_MAX_BLOCK_ROWS, (rows_total // sub) * sub)   # rows per grid step
    steps_total = pl.cdiv(rows_total, bm)
    # Split across 2 cores (v7x megacore) only when it divides evenly, so no
    # grid block is ever fully out of bounds.
    nsplit = 2 if (steps_total >= 2 and steps_total % 2 == 0) else 1
    steps_per_split = steps_total // nsplit
    return rows_total, bm, nsplit, steps_per_split


# ---------------------------------------------------------------------------
# Kernels
# ---------------------------------------------------------------------------
def _sum_log_kernel(x_ref, o_ref, *, rows_total, bm, steps_per_split):
    """Accumulate sum(log(x)) as an (8,128) f32 partial resident in o_ref."""
    c = pl.program_id(0)           # core / split index       (parallel)
    i = pl.program_id(1)           # step within the split    (arbitrary)

    @pl.when(i == 0)
    def _():
        o_ref[...] = jnp.zeros_like(o_ref)

    g = c * steps_per_split + i                      # global block index
    row_ids = g * bm + jax.lax.broadcasted_iota(jnp.int32, (bm, _LANES), 0)
    valid = row_ids < rows_total                     # mask ragged last block

    x = x_ref[...].astype(jnp.float32)
    x = jnp.where(valid, x, 1.0)                     # log(1) == 0 -> no contribution
    contrib = jnp.log(x)
    # Fold (bm,128) -> (8,128) with elementwise vreg adds (no per-step XLU reduce).
    o_ref[...] += contrib.reshape(bm // 8, 8, _LANES).sum(axis=0)


def _sse_kernel(a_ref, b_ref, o_ref, *, rows_total, bm, steps_per_split):
    """Accumulate sum((a-b)^2) as an (8,128) f32 partial resident in o_ref."""
    c = pl.program_id(0)
    i = pl.program_id(1)

    @pl.when(i == 0)
    def _():
        o_ref[...] = jnp.zeros_like(o_ref)

    g = c * steps_per_split + i
    row_ids = g * bm + jax.lax.broadcasted_iota(jnp.int32, (bm, _LANES), 0)
    valid = row_ids < rows_total

    d = a_ref[...].astype(jnp.float32) - b_ref[...].astype(jnp.float32)
    d = jnp.where(valid, d, 0.0)
    o_ref[...] += (d * d).reshape(bm // 8, 8, _LANES).sum(axis=0)


# ---------------------------------------------------------------------------
# Wrappers
# ---------------------------------------------------------------------------
def _sum_log(x):
    """sum(log(x)) over all elements."""
    flat = x.reshape(-1)
    n = flat.shape[0]
    if n < _MIN_PALLAS_ELEMS:
        # Tiny tensor: plain jnp beats the pallas_call launch cost.
        return jnp.sum(jnp.log(flat.astype(jnp.float32)))

    rows_total, bm, nsplit, steps_per_split = _tiling(n, flat.dtype)
    n_main = rows_total * _LANES
    main = flat[:n_main].reshape(rows_total, _LANES)   # no-copy when n % 128 == 0

    kernel = functools.partial(_sum_log_kernel, rows_total=rows_total, bm=bm,
                               steps_per_split=steps_per_split)
    partials = pl.pallas_call(
        kernel,
        out_shape=jax.ShapeDtypeStruct((nsplit * 8, _LANES), jnp.float32),
        grid_spec=pltpu.PrefetchScalarGridSpec(
            num_scalar_prefetch=0,
            grid=(nsplit, steps_per_split),
            in_specs=[pl.BlockSpec((bm, _LANES),
                                   lambda c, i: (c * steps_per_split + i, 0))],
            out_specs=pl.BlockSpec((8, _LANES), lambda c, i: (c, 0)),
        ),
        compiler_params=pltpu.CompilerParams(
            dimension_semantics=("parallel", "arbitrary")),
    )(main)

    total = jnp.sum(partials)
    if n_main < n:                                     # < 128-element tail
        total = total + jnp.sum(jnp.log(flat[n_main:].astype(jnp.float32)))
    return total


def _sum_sq_err(a, b):
    """sum((a-b)^2) over all elements."""
    fa = a.reshape(-1)
    fb = b.reshape(-1)
    n = fa.shape[0]
    if n < _MIN_PALLAS_ELEMS:
        d = fa.astype(jnp.float32) - fb.astype(jnp.float32)
        return jnp.sum(d * d)

    rows_total, bm, nsplit, steps_per_split = _tiling(n, fa.dtype)
    n_main = rows_total * _LANES
    ma = fa[:n_main].reshape(rows_total, _LANES)
    mb = fb[:n_main].reshape(rows_total, _LANES)

    kernel = functools.partial(_sse_kernel, rows_total=rows_total, bm=bm,
                               steps_per_split=steps_per_split)
    partials = pl.pallas_call(
        kernel,
        out_shape=jax.ShapeDtypeStruct((nsplit * 8, _LANES), jnp.float32),
        grid_spec=pltpu.PrefetchScalarGridSpec(
            num_scalar_prefetch=0,
            grid=(nsplit, steps_per_split),
            in_specs=[
                pl.BlockSpec((bm, _LANES), lambda c, i: (c * steps_per_split + i, 0)),
                pl.BlockSpec((bm, _LANES), lambda c, i: (c * steps_per_split + i, 0)),
            ],
            out_specs=pl.BlockSpec((8, _LANES), lambda c, i: (c, 0)),
        ),
        compiler_params=pltpu.CompilerParams(
            dimension_semantics=("parallel", "arbitrary")),
    )(ma, mb)

    total = jnp.sum(partials)
    if n_main < n:
        dt = fa[n_main:].astype(jnp.float32) - fb[n_main:].astype(jnp.float32)
        total = total + jnp.sum(dt * dt)
    return total


def rate_distortion_loss(output, target, lmbda=None, beta=None):
    """JAX/Pallas equivalent of RateDistortionLoss.forward.

    output: dict with keys 'x_hat' (N,C,H,W) and 'likelihoods' (dict of arrays).
    target: (N,C,H,W)
    """
    assert lmbda is None or beta is None
    N, _, H, W = target.shape
    num_pixels = N * H * W

    # bpp_loss = sum_k  log(likelihoods_k).sum() / (-ln(2) * num_pixels)
    bpp_loss = jnp.float32(0.0)
    for lk in output["likelihoods"].values():
        bpp_loss = bpp_loss + _sum_log(lk) / (-math.log(2) * num_pixels)

    # mse_loss = mean((x_hat - target)^2)   (nn.MSELoss default reduction='mean')
    x_hat = output["x_hat"]
    total_elems = 1
    for d in target.shape:
        total_elems *= d
    mse_loss = _sum_sq_err(x_hat, target) / jnp.float32(total_elems)

    out = {"bpp_loss": bpp_loss, "mse_loss": mse_loss}
    if lmbda is not None:
        out["loss"] = lmbda * (255.0 ** 2) * mse_loss + bpp_loss
    else:
        out["loss"] = mse_loss + beta * bpp_loss
    return out


# ---------------------------------------------------------------------------
# Demo / check
# ---------------------------------------------------------------------------
if __name__ == "__main__":
    key = jax.random.PRNGKey(0)
    k1, k2, k3, k4 = jax.random.split(key, 4)

    # Small image batch; likelihood 'y' is big enough to exercise the multi-step
    # masked + 2-way-split Pallas path, 'z' is tiny and takes the plain-jnp path.
    N, C, H, W = 2, 3, 64, 64
    target = jax.random.uniform(k1, (N, C, H, W), dtype=jnp.float32)
    x_hat = target + 0.05 * jax.random.normal(k2, (N, C, H, W), dtype=jnp.float32)

    lik_y = jax.random.uniform(k3, (N, 192, 32, 32), dtype=jnp.float32,
                               minval=0.01, maxval=1.0)
    lik_z = jax.random.uniform(k4, (N, 128, 4, 4), dtype=jnp.float32,
                               minval=0.01, maxval=1.0)

    output = {"x_hat": x_hat, "likelihoods": {"y": lik_y, "z": lik_z}}

    lmbda = 0.01
    result = rate_distortion_loss(output, target, lmbda=lmbda)
    result = jax.tree_util.tree_map(jax.block_until_ready, result)

    # Pure-JAX reference check.
    num_pixels = N * H * W
    ref_bpp = (jnp.sum(jnp.log(lik_y)) + jnp.sum(jnp.log(lik_z))) / (-math.log(2) * num_pixels)
    ref_mse = jnp.mean((x_hat - target) ** 2)
    ref_loss = lmbda * 255.0 ** 2 * ref_mse + ref_bpp

    assert jnp.allclose(result["bpp_loss"], ref_bpp, rtol=1e-4, atol=1e-4)
    assert jnp.allclose(result["mse_loss"], ref_mse, rtol=1e-4, atol=1e-6)
    assert jnp.allclose(result["loss"], ref_loss, rtol=1e-4, atol=1e-3)

    print("KERNEL_OK")
</pallas_src>

<mosaic_0001>
module attributes {stable_mosaic.version = 11 : i64} {
  func.func @_sum_log_kernel(%arg0: i32, %arg1: i32, %arg2: memref<2048x128xf32, #tpu.memory_space<vmem>>, %arg3: memref<8x128xf32, #tpu.memory_space<vmem>>) attributes {dimension_semantics = [#tpu.dimension_semantics<parallel>, #tpu.dimension_semantics<arbitrary>], iteration_bounds = array<i64: 2, 1>, scalar_prefetch = 0 : i64, scratch_operands = 0 : i64, tpu.core_type = #tpu.core_type<tc>, window_params = [{transform_indices = @transform_0, window_bounds = array<i64: 2048, 128>}, {transform_indices = @transform_1, window_bounds = array<i64: 8, 128>}]} {
    %c0_i32 = arith.constant 0 : i32
    %0 = arith.cmpi eq, %arg1, %c0_i32 : i32
    %1 = arith.extui %0 : i1 to i32
    %c0_i32_0 = arith.constant 0 : i32
    %2 = arith.cmpi ne, %1, %c0_i32_0 : i32
    scf.if %2 {
      %cst_7 = arith.constant 0.000000e+00 : f32
      %20 = vector.broadcast %cst_7 : f32 to vector<8x128xf32>
      %c0_8 = arith.constant 0 : index
      %c0_9 = arith.constant 0 : index
      %21 = vector.load %arg3[%c0_8, %c0_9] : memref<8x128xf32, #tpu.memory_space<vmem>>, vector<8x128xf32>
      tpu.vector_store %arg3[%c0_8, %c0_9], %20 {strides = array<i32>} : memref<8x128xf32, #tpu.memory_space<vmem>>, vector<8x128xf32>,
    } else {
    }
    %c1_i32 = arith.constant 1 : i32
    %3 = arith.muli %arg0, %c1_i32 : i32
    %4 = arith.addi %3, %arg1 : i32
    %c2048_i32 = arith.constant 2048 : i32
    %5 = arith.muli %4, %c2048_i32 : i32
    %6 = tpu.iota {dimensions = array<i32: 0>} : vector<2048x128xi32>
    %7 = vector.broadcast %5 : i32 to vector<2048x128xi32>
    %8 = arith.addi %7, %6 : vector<2048x128xi32>
    %c3072_i32 = arith.constant 3072 : i32
    %9 = vector.broadcast %c3072_i32 : i32 to vector<2048x128xi32>
    %10 = arith.cmpi slt, %8, %9 : vector<2048x128xi32>
    %c0 = arith.constant 0 : index
    %c0_1 = arith.constant 0 : index
    %11 = vector.load %arg2[%c0, %c0_1] : memref<2048x128xf32, #tpu.memory_space<vmem>>, vector<2048x128xf32>
    %cst = arith.constant 1.000000e+00 : f32
    %12 = vector.broadcast %cst : f32 to vector<2048x128xf32>
    %13 = arith.select %10, %11, %12 : vector<2048x128xi1>, vector<2048x128xf32>
    %14 = math.log %13 : vector<2048x128xf32>
    %c0_2 = arith.constant 0 : index
    %c0_3 = arith.constant 0 : index
    %15 = vector.load %arg3[%c0_2, %c0_3] : memref<8x128xf32, #tpu.memory_space<vmem>>, vector<8x128xf32>
    %16 = vector.shape_cast %14 : vector<2048x128xf32> to vector<256x8x128xf32>
    %cst_4 = arith.constant dense<0.000000e+00> : vector<8x128xf32>
    %17 = vector.multi_reduction <add>, %16, %cst_4 [0] : vector<256x8x128xf32> to vector<8x128xf32>
    %18 = arith.addf %15, %17 : vector<8x128xf32>
    %c0_5 = arith.constant 0 : index
    %c0_6 = arith.constant 0 : index
    %19 = vector.load %arg3[%c0_5, %c0_6] : memref<8x128xf32, #tpu.memory_space<vmem>>, vector<8x128xf32>
    tpu.vector_store %arg3[%c0_5, %c0_6], %18 {strides = array<i32>} : memref<8x128xf32, #tpu.memory_space<vmem>>, vector<8x128xf32>,
    return
  }
  func.func @transform_0(%arg0: i32, %arg1: i32) -> (i32, i32) {
    %c1_i32 = arith.constant 1 : i32
    %0 = arith.muli %arg0, %c1_i32 : i32
    %1 = arith.addi %0, %arg1 : i32
    %c0_i32 = arith.constant 0 : i32
    %c0_i32_0 = arith.constant 0 : i32
    return %1, %c0_i32 : i32, i32
  }
  func.func @transform_1(%arg0: i32, %arg1: i32) -> (i32, i32) {
    %c0_i32 = arith.constant 0 : i32
    %c0_i32_0 = arith.constant 0 : i32
    return %arg0, %c0_i32 : i32, i32
  }
}

</mosaic_0001>

<llo_original>
// kernel: tpu_custom_call.1
$region0: #{tpu_custom_call.1}
  #allocation0 [shape = 'u32[]', space=smem, size = 0x4, offset = 0x4, fixed_abs, tag = 'smem constant byte address 0x4 - core index']
  #allocation1 [shape = 'u32[144,128]{1,0:T(1,128)}', space=vmem, size = 0x12000, scoped, tag = 'internal scratch']
  %s0 = inlined_call_operand.hbm [shape: f32[3072,128], index: 0, kind: input, shape index: {}]
  %s1 = inlined_call_operand.hbm [shape: f32[16,128], index: 1, kind: output, shape index: {}]
  %s2 = sld [smem:[#allocation0]]
  $region45: #{tpu_custom_call.1} parent=0
    _
  %s4 = ssub.s32 1, %s2
  %s5 = scalar_select 0, %s4, %s2
  $region1: #{tpu_custom_call.1} parent=0
    #allocation2 [shape = 'u8[2097152]{0}', space=vmem, size = 0x200000, scoped, tag = 'input window, operand 0']
    #allocation3 [shape = 's32[2]{0}', space=sflag, size = 0x8, scoped, tag = 'scoped memory for tpu_custom_call.1']
    #allocation4 [shape = 's32[2]{0}', space=sflag, size = 0x8, scoped, tag = 'scoped memory for tpu_custom_call.1']
    #allocation5 [shape = 'u8[8192]{0}', space=vmem, size = 0x2000, scoped, tag = 'output window, operand 0']
    %6 = vsyncpa [#allocation3], 0
    %s7 = scalar_lea.sflag [#allocation3], 1
    %8 = vsyncpa %s7, 0
    %9 = vsyncpa [#allocation4], 0
    %s10 = scalar_lea.sflag [#allocation4], 1
    %11 = vsyncpa %s10, 0
    loop: start=0, step=1, limit=4
    $region2: #{tpu_custom_call.1} parent=1 // loop_pre_header
      _
    $region3: #{tpu_custom_call.1} parent=1 // loop_header
      %s13 = sphi 0, %s17
      %p14 = scmp.ge.s32.totalorder %s13, 4
      %s20 = sphi 0, %s32
      %s21 = sphi 0, %s28
      %s22 = sphi 0, %s20
      %s23 = sphi 0, %s21
      %s24 = sphi 0, %s22
      %s25 = sphi 0, %s23
      %s37 = sphi 0, %s39
      %s40 = sphi 0, %s37
      %s41 = sphi 0, %s40
      %s57 = sphi 0, %s41
      %s63 = sphi 0, %s65
      %s66 = sphi 0, %s63
      %s67 = sphi 0, %s66
      %s83 = sphi 0, %s67
    $region4: #{tpu_custom_call.1} parent=1 // loop_header_branch
      %16 = sbr.rel (%p14) target = $region8
    $region5: #{tpu_custom_call.1} parent=1 // loop_body
      %s18 = ssub.s32 %s13, 1
      %s19 = ssub.s32 %s13, 2
      %s26 = sadd.s32 1, %s21
      %p27 = scmp.ge.s32.totalorder %s26, 1
      %s28 = scalar_select %p27, 0, %s26
      %s29 = sadd.s32 1, %s20
      %s30 = scalar_select %p27, %s29, %s20
      %p31 = scmp.ge.s32.totalorder %s30, 2
      %s32 = scalar_select %p31, 0, %s30
      %s33 = sadd.s32 %s20, %s21
      %s34 = sadd.s32 %s32, %s28
      %s35 = ssub.s32 %s33, %s34
      %p36 = scmp.eq.s32.totalorder %s35, 0
      %s38 = sadd.s32 %s37, 1
      %s39 = scalar_select %p36, %s37, %s38
      %p42 = pneg %p36
      %p43 = scmp.eq.s32.totalorder %s13, 1
      %p44 = por %p42, %p43
      %p45 = scmp.ne.s32.totalorder %s37, %s40
      %p46 = scmp.eq.s32.totalorder %s13, 0
      %p47 = por %p45, %p46
      %p48 = scmp.ne.s32.totalorder %s37, %s40
      %p49 = scmp.eq.s32.totalorder %s18, 1
      %p50 = por %p48, %p49
      %p51 = scmp.ne.s32.totalorder %s40, %s41
      %p52 = scmp.eq.s32.totalorder %s18, 0
      %p53 = por %p51, %p52
      %p54 = scmp.ne.s32.totalorder %s40, %s41
      %p55 = scmp.eq.s32.totalorder %s19, 1
      %p56 = por %p54, %p55
      %p58 = scmp.ne.s32.totalorder %s41, %s57
      %p59 = scmp.eq.s32.totalorder %s19, 0
      %p60 = por %p58, %p59
      %s61 = ssub.s32 %s20, %s32
      %p62 = scmp.eq.s32.totalorder %s61, 0
      %s64 = sadd.s32 %s63, 1
      %s65 = scalar_select %p62, %s63, %s64
      %p68 = pneg %p62
      %p69 = scmp.eq.s32.totalorder %s13, 1
      %p70 = por %p68, %p69
      %p71 = scmp.ne.s32.totalorder %s63, %s66
      %p72 = scmp.eq.s32.totalorder %s13, 0
      %p73 = por %p71, %p72
      %p74 = scmp.ne.s32.totalorder %s63, %s66
      %p75 = scmp.eq.s32.totalorder %s18, 1
      %p76 = por %p74, %p75
      %p77 = scmp.ne.s32.totalorder %s66, %s67
      %p78 = scmp.eq.s32.totalorder %s18, 0
      %p79 = por %p77, %p78
      %p80 = scmp.ne.s32.totalorder %s66, %s67
      %p81 = scmp.eq.s32.totalorder %s19, 1
      %p82 = por %p80, %p81
      %p84 = scmp.ne.s32.totalorder %s67, %s83
      %p85 = scmp.eq.s32.totalorder %s19, 0
      %p86 = por %p84, %p85
      %p87 = scmp.le.s32.totalorder 1, %s13
      %p88 = scmp.lt.s32.totalorder %s13, 3
      %p89 = pnand %p87, %p88
      %p90 = pneg %p89
      // Predicated region
      $region9: #{tpu_custom_call.1} parent=5 // pred_check
        _
      $region10: #{tpu_custom_call.1} parent=5 // pred_check_branch
        %92 = sbr.rel (%p89) target = $region12
      $region11: #{tpu_custom_call.1} parent=5 // pred_region
        %s93 = ssub.s32 %s13, 1
      $region12: #{tpu_custom_call.1} parent=5 // pred_fallthru
        _
      %p94 = scmp.lt.s32.totalorder %s13, 2
      // Predicated region
      $region13: #{tpu_custom_call.1} parent=5 // pred_check
        %p95 = pneg %p94
      $region14: #{tpu_custom_call.1} parent=5 // pred_check_branch
        %97 = sbr.rel (%p95) target = $region16
      $region15: #{tpu_custom_call.1} parent=5 // pred_region
        // Predicated region
        $region17: #{tpu_custom_call.1} parent=15 // pred_check
          %p98 = pneg %p47
        $region18: #{tpu_custom_call.1} parent=15 // pred_check_branch
          %100 = sbr.rel (%p98) target = $region20
        $region19: #{tpu_custom_call.1} parent=15 // pred_region
          %s101 = sand.u32 %s37, 1
          %s102 = scalar_lea.sflag [#allocation3], %s101
          %s103 = sand.u32 %s37, 1
          %s104 = smul.addr %s103, 2048
          %s105 = scalar_lea.vmem [#allocation2], %s104
          %s106 = sadd.s32 %s20, %s21
          %s107 = smul.u32 256, %s106
          %s108 = ssub.s32 384, %s107
          %p109 = scmp.lt.s32.totalorder %s108, 256
          %s110 = scalar_select %p109, %s108, 256
          %s111 = smul.u32 128, %s110
          %s113 = ssub.s32 32768, %s111
          %114 = vsyncadd %s102, %s113
          %p115 = scmp.ne.s32.totalorder 0, %s111
          %s116 = smul.addr %s107, 128
          %s117 = scalar_lea.hbm %s0, %s116
          %s118 = smul.u32 8, %s110
          %s119 = sshll.u32 %s105, 4
          %s120 = int_to_ptr.vmem [resolvable:$true] %s119
          %s121 = sshll.u32 %s118, 4
          %125 = dma.hbm_to_vmem [thread:$0]  (%p115), %s117, %s121, %s120, %s102, 128, 128, 8
        $region20: #{tpu_custom_call.1} parent=15 // pred_fallthru
          _
      $region16: #{tpu_custom_call.1} parent=5 // pred_fallthru
        _
      %p126 = scmp.le.s32.totalorder 1, %s13
      %p127 = scmp.lt.s32.totalorder %s13, 3
      %p128 = pnand %p126, %p127
      %p129 = pneg %p128
      // Predicated region
      $region21: #{tpu_custom_call.1} parent=5 // pred_check
        _
      $region22: #{tpu_custom_call.1} parent=5 // pred_check_branch
        %131 = sbr.rel (%p128) target = $region24
      $region23: #{tpu_custom_call.1} parent=5 // pred_region
        %s132 = ssub.s32 %s13, 1
        %s133 = sand.u32 %s40, 1
        %s134 = scalar_lea.sflag [#allocation3], %s133
        %s135 = sand.u32 %s40, 1
        %s136 = smul.addr %s135, 2048
        %s137 = scalar_lea.vmem [#allocation2], %s136
        // Predicated region
        $region25: #{tpu_custom_call.1} parent=23 // pred_check
          %p138 = pneg %p53
        $region26: #{tpu_custom_call.1} parent=23 // pred_check_branch
          %140 = sbr.rel (%p138) target = $region28
        $region27: #{tpu_custom_call.1} parent=23 // pred_region
          %141 = dma.done %s134, 32768
        $region28: #{tpu_custom_call.1} parent=23 // pred_fallthru
          _
        %s142 = sand.u32 %s40, 1
        %s143 = scalar_lea.sflag [#allocation3], %s142
        %s144 = sand.u32 %s40, 1
        %s145 = smul.addr %s144, 2048
        %s146 = scalar_lea.vmem [#allocation2], %s145
        %p147 = pneg %p53
        %p148 = pneg %p50
        %p149 = pneg %p79
        %p150 = pneg %p76
        %s151 = sand.u32 %s66, 1
        %s152 = scalar_lea.sflag [#allocation4], %s151
        %s153 = sand.u32 %s66, 1
        %s154 = smul.addr %s153, 8
        %s155 = scalar_lea.vmem [#allocation5], %s154
        %s156 = sadd.s32 %s22, %s23
        %s157 = smul.u32 256, %s156
        %s158 = ssub.s32 384, %s157
        %p159 = scmp.lt.s32.totalorder %s158, 256
        %s160 = scalar_select %p159, %s158, 256
        %s161 = smul.u32 128, %s160
        %p162 = scmp.eq.s32.totalorder %s23, 0
        // Predicated region
        $region29: #{tpu_custom_call.1} parent=23 // pred_check
          %p163 = pneg %p162
        $region30: #{tpu_custom_call.1} parent=23 // pred_check_branch
          %165 = sbr.rel (%p163) target = $region32
        $region31: #{tpu_custom_call.1} parent=23 // pred_region
          %166 = vst [vmem:[%s155] sm:$0xff] 0.0
        $region32: #{tpu_custom_call.1} parent=23 // pred_fallthru
          _
        %s167 = sadd.s32 %s22, %s23
        %s168 = smul.u32 %s167, 2048
        %v169 = vlaneseq
        %v170 = vshrl.u32 %v169, 7
        %v171 = vadd.s32 %v170, 8
        %v172 = vadd.s32 %v170, 16
        %v173 = vadd.s32 %v170, 24
        %v174 = vadd.s32 %v170, 32
        %v175 = vadd.s32 %v170, 40
        %v176 = vadd.s32 %v170, 48
        %v177 = vadd.s32 %v170, 56
        %v178 = vadd.s32 %v170, 64
        %v179 = vadd.s32 %v170, 72
        %v180 = vadd.s32 %v170, 80
        %v181 = vadd.s32 %v170, 88
        %v182 = vadd.s32 %v170, 96
        %v183 = vadd.s32 %v170, 104
        %v184 = vadd.s32 %v170, 112
        %v185 = vadd.s32 %v170, 120
        %v186 = vadd.s32 %v170, 128
        %v187 = vadd.s32 %v170, 136
        %v188 = vadd.s32 %v170, 144
        %v189 = vadd.s32 %v170, 152
        %v190 = vadd.s32 %v170, 160
        %v191 = vadd.s32 %v170, 168
        %v192 = vadd.s32 %v170, 176
        %v193 = vadd.s32 %v170, 184
        %v194 = vadd.s32 %v170, 192
        %v195 = vadd.s32 %v170, 200
        %v196 = vadd.s32 %v170, 208
        %v197 = vadd.s32 %v170, 216
        %v198 = vadd.s32 %v170, 224
        %v199 = vadd.s32 %v170, 232
        %v200 = vadd.s32 %v170, 240
        %v201 = vadd.s32 %v170, 248
        %v202 = vadd.s32 %v170, 256
        %v203 = vadd.s32 %v170, 264
        %v204 = vadd.s32 %v170, 272
        %v205 = vadd.s32 %v170, 280
        %v206 = vadd.s32 %v170, 288
        %v207 = vadd.s32 %v170, 296
        %v208 = vadd.s32 %v170, 304
        %v209 = vadd.s32 %v170, 312
        %v210 = vadd.s32 %v170, 320
        %v211 = vadd.s32 %v170, 328
        %v212 = vadd.s32 %v170, 336
        %v213 = vadd.s32 %v170, 344
        %v214 = vadd.s32 %v170, 352
        %v215 = vadd.s32 %v170, 360
        %v216 = vadd.s32 %v170, 368
        %v217 = vadd.s32 %v170, 376
        %v218 = vadd.s32 %v170, 384
        %v219 = vadd.s32 %v170, 392
        %v220 = vadd.s32 %v170, 400
        %v221 = vadd.s32 %v170, 408
        %v222 = vadd.s32 %v170, 416
        %v223 = vadd.s32 %v170, 424
        %v224 = vadd.s32 %v170, 432
        %v225 = vadd.s32 %v170, 440
        %v226 = vadd.s32 %v170, 448
        %v227 = vadd.s32 %v170, 456
        %v228 = vadd.s32 %v170, 464
        %v229 = vadd.s32 %v170, 472
        %v230 = vadd.s32 %v170, 480
        %v231 = vadd.s32 %v170, 488
        %v232 = vadd.s32 %v170, 496
        %v233 = vadd.s32 %v170, 504
        %v234 = vadd.s32 %v170, 512
        %v235 = vadd.s32 %v170, 520
        %v236 = vadd.s32 %v170, 528
        %v237 = vadd.s32 %v170, 536
        %v238 = vadd.s32 %v170, 544
        %v239 = vadd.s32 %v170, 552
        %v240 = vadd.s32 %v170, 560
        %v241 = vadd.s32 %v170, 568
        %v242 = vadd.s32 %v170, 576
        %v243 = vadd.s32 %v170, 584
        %v244 = vadd.s32 %v170, 592
        %v245 = vadd.s32 %v170, 600
        %v246 = vadd.s32 %v170, 608
        %v247 = vadd.s32 %v170, 616
        %v248 = vadd.s32 %v170, 624
        %v249 = vadd.s32 %v170, 632
        %v250 = vadd.s32 %v170, 640
        %v251 = vadd.s32 %v170, 648
        %v252 = vadd.s32 %v170, 656
        %v253 = vadd.s32 %v170, 664
        %v254 = vadd.s32 %v170, 672
        %v255 = vadd.s32 %v170, 680
        %v256 = vadd.s32 %v170, 688
        %v257 = vadd.s32 %v170, 696
        %v258 = vadd.s32 %v170, 704
        %v259 = vadd.s32 %v170, 712
        %v260 = vadd.s32 %v170, 720
        %v261 = vadd.s32 %v170, 728
        %v262 = vadd.s32 %v170, 736
        %v263 = vadd.s32 %v170, 744
        %v264 = vadd.s32 %v170, 752
        %v265 = vadd.s32 %v170, 760
        %v266 = vadd.s32 %v170, 768
        %v267 = vadd.s32 %v170, 776
        %v268 = vadd.s32 %v170, 784
        %v269 = vadd.s32 %v170, 792
        %v270 = vadd.s32 %v170, 800
        %v271 = vadd.s32 %v170, 808
        %v272 = vadd.s32 %v170, 816
        %v273 = vadd.s32 %v170, 824
        %v274 = vadd.s32 %v170, 832
        %v275 = vadd.s32 %v170, 840
        %v276 = vadd.s32 %v170, 848
        %v277 = vadd.s32 %v170, 856
        %v278 = vadd.s32 %v170, 864
        %v279 = vadd.s32 %v170, 872
        %v280 = vadd.s32 %v170, 880
        %v281 = vadd.s32 %v170, 888
        %v282 = vadd.s32 %v170, 896
        %v283 = vadd.s32 %v170, 904
        %v284 = vadd.s32 %v170, 912
        %v285 = vadd.s32 %v170, 920
        %v286 = vadd.s32 %v170, 928
        %v287 = vadd.s32 %v170, 936
        %v288 = vadd.s32 %v170, 944
        %v289 = vadd.s32 %v170, 952
        %v290 = vadd.s32 %v170, 960
        %v291 = vadd.s32 %v170, 968
        %v292 = vadd.s32 %v170, 976
        %v293 = vadd.s32 %v170, 984
        %v294 = vadd.s32 %v170, 992
        %v295 = vadd.s32 %v170, 1000
        %v296 = vadd.s32 %v170, 1008
        %v297 = vadd.s32 %v170, 1016
        %v298 = vadd.s32 %v170, 1024
        %v299 = vadd.s32 %v170, 1032
        %v300 = vadd.s32 %v170, 1040
        %v301 = vadd.s32 %v170, 1048
        %v302 = vadd.s32 %v170, 1056
        %v303 = vadd.s32 %v170, 1064
        %v304 = vadd.s32 %v170, 1072
        %v305 = vadd.s32 %v170, 1080
        %v306 = vadd.s32 %v170, 1088
        %v307 = vadd.s32 %v170, 1096
        %v308 = vadd.s32 %v170, 1104
        %v309 = vadd.s32 %v170, 1112
        %v310 = vadd.s32 %v170, 1120
        %v311 = vadd.s32 %v170, 1128
        %v312 = vadd.s32 %v170, 1136
        %v313 = vadd.s32 %v170, 1144
        %v314 = vadd.s32 %v170, 1152
        %v315 = vadd.s32 %v170, 1160
        %v316 = vadd.s32 %v170, 1168
        %v317 = vadd.s32 %v170, 1176
        %v318 = vadd.s32 %v170, 1184
        %v319 = vadd.s32 %v170, 1192
        %v320 = vadd.s32 %v170, 1200
        %v321 = vadd.s32 %v170, 1208
        %v322 = vadd.s32 %v170, 1216
        %v323 = vadd.s32 %v170, 1224
        %v324 = vadd.s32 %v170, 1232
        %v325 = vadd.s32 %v170, 1240
        %v326 = vadd.s32 %v170, 1248
        %v327 = vadd.s32 %v170, 1256
        %v328 = vadd.s32 %v170, 1264
        %v329 = vadd.s32 %v170, 1272
        %v330 = vadd.s32 %v170, 1280
        %v331 = vadd.s32 %v170, 1288
        %v332 = vadd.s32 %v170, 1296
        %v333 = vadd.s32 %v170, 1304
        %v334 = vadd.s32 %v170, 1312
        %v335 = vadd.s32 %v170, 1320
        %v336 = vadd.s32 %v170, 1328
        %v337 = vadd.s32 %v170, 1336
        %v338 = vadd.s32 %v170, 1344
        %v339 = vadd.s32 %v170, 1352
        %v340 = vadd.s32 %v170, 1360
        %v341 = vadd.s32 %v170, 1368
        %v342 = vadd.s32 %v170, 1376
        %v343 = vadd.s32 %v170, 1384
        %v344 = vadd.s32 %v170, 1392
        %v345 = vadd.s32 %v170, 1400
        %v346 = vadd.s32 %v170, 1408
        %v347 = vadd.s32 %v170, 1416
        %v348 = vadd.s32 %v170, 1424
        %v349 = vadd.s32 %v170, 1432
        %v350 = vadd.s32 %v170, 1440
        %v351 = vadd.s32 %v170, 1448
        %v352 = vadd.s32 %v170, 1456
        %v353 = vadd.s32 %v170, 1464
        %v354 = vadd.s32 %v170, 1472
        %v355 = vadd.s32 %v170, 1480
        %v356 = vadd.s32 %v170, 1488
        %v357 = vadd.s32 %v170, 1496
        %v358 = vadd.s32 %v170, 1504
        %v359 = vadd.s32 %v170, 1512
        %v360 = vadd.s32 %v170, 1520
        %v361 = vadd.s32 %v170, 1528
        %v362 = vadd.s32 %v170, 1536
        %v363 = vadd.s32 %v170, 1544
        %v364 = vadd.s32 %v170, 1552
        %v365 = vadd.s32 %v170, 1560
        %v366 = vadd.s32 %v170, 1568
        %v367 = vadd.s32 %v170, 1576
        %v368 = vadd.s32 %v170, 1584
        %v369 = vadd.s32 %v170, 1592
        %v370 = vadd.s32 %v170, 1600
        %v371 = vadd.s32 %v170, 1608
        %v372 = vadd.s32 %v170, 1616
        %v373 = vadd.s32 %v170, 1624
        %v374 = vadd.s32 %v170, 1632
        %v375 = vadd.s32 %v170, 1640
        %v376 = vadd.s32 %v170, 1648
        %v377 = vadd.s32 %v170, 1656
        %v378 = vadd.s32 %v170, 1664
        %v379 = vadd.s32 %v170, 1672
        %v380 = vadd.s32 %v170, 1680
        %v381 = vadd.s32 %v170, 1688
        %v382 = vadd.s32 %v170, 1696
        %v383 = vadd.s32 %v170, 1704
        %v384 = vadd.s32 %v170, 1712
        %v385 = vadd.s32 %v170, 1720
        %v386 = vadd.s32 %v170, 1728
        %v387 = vadd.s32 %v170, 1736
        %v388 = vadd.s32 %v170, 1744
        %v389 = vadd.s32 %v170, 1752
        %v390 = vadd.s32 %v170, 1760
        %v391 = vadd.s32 %v170, 1768
        %v392 = vadd.s32 %v170, 1776
        %v393 = vadd.s32 %v170, 1784
        %v394 = vadd.s32 %v170, 1792
        %v395 = vadd.s32 %v170, 1800
        %v396 = vadd.s32 %v170, 1808
        %v397 = vadd.s32 %v170, 1816
        %v398 = vadd.s32 %v170, 1824
        %v399 = vadd.s32 %v170, 1832
        %v400 = vadd.s32 %v170, 1840
        %v401 = vadd.s32 %v170, 1848
        %v402 = vadd.s32 %v170, 1856
        %v403 = vadd.s32 %v170, 1864
        %v404 = vadd.s32 %v170, 1872
        %v405 = vadd.s32 %v170, 1880
        %v406 = vadd.s32 %v170, 1888
        %v407 = vadd.s32 %v170, 1896
        %v408 = vadd.s32 %v170, 1904
        %v409 = vadd.s32 %v170, 1912
        %v410 = vadd.s32 %v170, 1920
        %v411 = vadd.s32 %v170, 1928
        %v412 = vadd.s32 %v170, 1936
        %v413 = vadd.s32 %v170, 1944
        %v414 = vadd.s32 %v170, 1952
        %v415 = vadd.s32 %v170, 1960
        %v416 = vadd.s32 %v170, 1968
        %v417 = vadd.s32 %v170, 1976
        %v418 = vadd.s32 %v170, 1984
        %v419 = vadd.s32 %v170, 1992
        %v420 = vadd.s32 %v170, 2000
        %v421 = vadd.s32 %v170, 2008
        %v422 = vadd.s32 %v170, 2016
        %v423 = vadd.s32 %v170, 2024
        %v424 = vadd.s32 %v170, 2032
        %v425 = vadd.s32 %v170, 2040
        %v426 = vstv %s168
        %v427 = vadd.s32 %v426, %v170
        %v428 = vadd.s32 %v426, %v171
        %v429 = vadd.s32 %v426, %v172
        %v430 = vadd.s32 %v426, %v173
        %v431 = vadd.s32 %v426, %v174
        %v432 = vadd.s32 %v426, %v175
        %v433 = vadd.s32 %v426, %v176
        %v434 = vadd.s32 %v426, %v177
        %v435 = vadd.s32 %v426, %v178
        %v436 = vadd.s32 %v426, %v179
        %v437 = vadd.s32 %v426, %v180
        %v438 = vadd.s32 %v426, %v181
        %v439 = vadd.s32 %v426, %v182
        %v440 = vadd.s32 %v426, %v183
        %v441 = vadd.s32 %v426, %v184
        %v442 = vadd.s32 %v426, %v185
        %v443 = vadd.s32 %v426, %v186
        %v444 = vadd.s32 %v426, %v187
        %v445 = vadd.s32 %v426, %v188
        %v446 = vadd.s32 %v426, %v189
        %v447 = vadd.s32 %v426, %v190
        %v448 = vadd.s32 %v426, %v191
        %v449 = vadd.s32 %v426, %v192
        %v450 = vadd.s32 %v426, %v193
        %v451 = vadd.s32 %v426, %v194
        %v452 = vadd.s32 %v426, %v195
        %v453 = vadd.s32 %v426, %v196
        %v454 = vadd.s32 %v426, %v197
        %v455 = vadd.s32 %v426, %v198
        %v456 = vadd.s32 %v426, %v199
        %v457 = vadd.s32 %v426, %v200
        %v458 = vadd.s32 %v426, %v201
        %v459 = vadd.s32 %v426, %v202
        %v460 = vadd.s32 %v426, %v203
        %v461 = vadd.s32 %v426, %v204
        %v462 = vadd.s32 %v426, %v205
        %v463 = vadd.s32 %v426, %v206
        %v464 = vadd.s32 %v426, %v207
        %v465 = vadd.s32 %v426, %v208
        %v466 = vadd.s32 %v426, %v209
        %v467 = vadd.s32 %v426, %v210
        %v468 = vadd.s32 %v426, %v211
        %v469 = vadd.s32 %v426, %v212
        %v470 = vadd.s32 %v426, %v213
        %v471 = vadd.s32 %v426, %v214
        %v472 = vadd.s32 %v426, %v215
        %v473 = vadd.s32 %v426, %v216
        %v474 = vadd.s32 %v426, %v217
        %v475 = vadd.s32 %v426, %v218
        %v476 = vadd.s32 %v426, %v219
        %v477 = vadd.s32 %v426, %v220
        %v478 = vadd.s32 %v426, %v221
        %v479 = vadd.s32 %v426, %v222
        %v480 = vadd.s32 %v426, %v223
        %v481 = vadd.s32 %v426, %v224
        %v482 = vadd.s32 %v426, %v225
        %v483 = vadd.s32 %v426, %v226
        %v484 = vadd.s32 %v426, %v227
        %v485 = vadd.s32 %v426, %v228
        %v486 = vadd.s32 %v426, %v229
        %v487 = vadd.s32 %v426, %v230
        %v488 = vadd.s32 %v426, %v231
        %v489 = vadd.s32 %v426, %v232
        %v490 = vadd.s32 %v426, %v233
        %v491 = vadd.s32 %v426, %v234
        %v492 = vadd.s32 %v426, %v235
        %v493 = vadd.s32 %v426, %v236
        %v494 = vadd.s32 %v426, %v237
        %v495 = vadd.s32 %v426, %v238
        %v496 = vadd.s32 %v426, %v239
        %v497 = vadd.s32 %v426, %v240
        %v498 = vadd.s32 %v426, %v241
        %v499 = vadd.s32 %v426, %v242
        %v500 = vadd.s32 %v426, %v243
        %v501 = vadd.s32 %v426, %v244
        %v502 = vadd.s32 %v426, %v245
        %v503 = vadd.s32 %v426, %v246
        %v504 = vadd.s32 %v426, %v247
        %v505 = vadd.s32 %v426, %v248
        %v506 = vadd.s32 %v426, %v249
        %v507 = vadd.s32 %v426, %v250
        %v508 = vadd.s32 %v426, %v251
        %v509 = vadd.s32 %v426, %v252
        %v510 = vadd.s32 %v426, %v253
        %v511 = vadd.s32 %v426, %v254
        %v512 = vadd.s32 %v426, %v255
        %v513 = vadd.s32 %v426, %v256
        %v514 = vadd.s32 %v426, %v257
        %v515 = vadd.s32 %v426, %v258
        %v516 = vadd.s32 %v426, %v259
        %v517 = vadd.s32 %v426, %v260
        %v518 = vadd.s32 %v426, %v261
        %v519 = vadd.s32 %v426, %v262
        %v520 = vadd.s32 %v426, %v263
        %v521 = vadd.s32 %v426, %v264
        %v522 = vadd.s32 %v426, %v265
        %v523 = vadd.s32 %v426, %v266
        %v524 = vadd.s32 %v426, %v267
        %v525 = vadd.s32 %v426, %v268
        %v526 = vadd.s32 %v426, %v269
        %v527 = vadd.s32 %v426, %v270
        %v528 = vadd.s32 %v426, %v271
        %v529 = vadd.s32 %v426, %v272
        %v530 = vadd.s32 %v426, %v273
        %v531 = vadd.s32 %v426, %v274
        %v532 = vadd.s32 %v426, %v275
        %v533 = vadd.s32 %v426, %v276
        %v534 = vadd.s32 %v426, %v277
        %v535 = vadd.s32 %v426, %v278
        %v536 = vadd.s32 %v426, %v279
        %v537 = vadd.s32 %v426, %v280
        %v538 = vadd.s32 %v426, %v281
        %v539 = vadd.s32 %v426, %v282
        %v540 = vadd.s32 %v426, %v283
        %v541 = vadd.s32 %v426, %v284
        %v542 = vadd.s32 %v426, %v285
        %v543 = vadd.s32 %v426, %v286
        %v544 = vadd.s32 %v426, %v287
        %v545 = vadd.s32 %v426, %v288
        %v546 = vadd.s32 %v426, %v289
        %v547 = vadd.s32 %v426, %v290
        %v548 = vadd.s32 %v426, %v291
        %v549 = vadd.s32 %v426, %v292
        %v550 = vadd.s32 %v426, %v293
        %v551 = vadd.s32 %v426, %v294
        %v552 = vadd.s32 %v426, %v295
        %v553 = vadd.s32 %v426, %v296
        %v554 = vadd.s32 %v426, %v297
        %v555 = vadd.s32 %v426, %v298
        %v556 = vadd.s32 %v426, %v299
        %v557 = vadd.s32 %v426, %v300
        %v558 = vadd.s32 %v426, %v301
        %v559 = vadd.s32 %v426, %v302
        %v560 = vadd.s32 %v426, %v303
        %v561 = vadd.s32 %v426, %v304
        %v562 = vadd.s32 %v426, %v305
        %v563 = vadd.s32 %v426, %v306
        %v564 = vadd.s32 %v426, %v307
        %v565 = vadd.s32 %v426, %v308
        %v566 = vadd.s32 %v426, %v309
        %v567 = vadd.s32 %v426, %v310
        %v568 = vadd.s32 %v426, %v311
        %v569 = vadd.s32 %v426, %v312
        %v570 = vadd.s32 %v426, %v313
        %v571 = vadd.s32 %v426, %v314
        %v572 = vadd.s32 %v426, %v315
        %v573 = vadd.s32 %v426, %v316
        %v574 = vadd.s32 %v426, %v317
        %v575 = vadd.s32 %v426, %v318
        %v576 = vadd.s32 %v426, %v319
        %v577 = vadd.s32 %v426, %v320
        %v578 = vadd.s32 %v426, %v321
        %v579 = vadd.s32 %v426, %v322
        %v580 = vadd.s32 %v426, %v323
        %v581 = vadd.s32 %v426, %v324
        %v582 = vadd.s32 %v426, %v325
        %v583 = vadd.s32 %v426, %v326
        %v584 = vadd.s32 %v426, %v327
        %v585 = vadd.s32 %v426, %v328
        %v586 = vadd.s32 %v426, %v329
        %v587 = vadd.s32 %v426, %v330
        %v588 = vadd.s32 %v426, %v331
        %v589 = vadd.s32 %v426, %v332
        %v590 = vadd.s32 %v426, %v333
        %v591 = vadd.s32 %v426, %v334
        %v592 = vadd.s32 %v426, %v335
        %v593 = vadd.s32 %v426, %v336
        %v594 = vadd.s32 %v426, %v337
        %v595 = vadd.s32 %v426, %v338
        %v596 = vadd.s32 %v426, %v339
        %v597 = vadd.s32 %v426, %v340
        %v598 = vadd.s32 %v426, %v341
        %v599 = vadd.s32 %v426, %v342
        %v600 = vadd.s32 %v426, %v343
        %v601 = vadd.s32 %v426, %v344
        %v602 = vadd.s32 %v426, %v345
        %v603 = vadd.s32 %v426, %v346
        %v604 = vadd.s32 %v426, %v347
        %v605 = vadd.s32 %v426, %v348
        %v606 = vadd.s32 %v426, %v349
        %v607 = vadd.s32 %v426, %v350
        %v608 = vadd.s32 %v426, %v351
        %v609 = vadd.s32 %v426, %v352
        %v610 = vadd.s32 %v426, %v353
        %v611 = vadd.s32 %v426, %v354
        %v612 = vadd.s32 %v426, %v355
        %v613 = vadd.s32 %v426, %v356
        %v614 = vadd.s32 %v426, %v357
        %v615 = vadd.s32 %v426, %v358
        %v616 = vadd.s32 %v426, %v359
        %v617 = vadd.s32 %v426, %v360
        %v618 = vadd.s32 %v426, %v361
        %v619 = vadd.s32 %v426, %v362
        %v620 = vadd.s32 %v426, %v363
        %v621 = vadd.s32 %v426, %v364
        %v622 = vadd.s32 %v426, %v365
        %v623 = vadd.s32 %v426, %v366
        %v624 = vadd.s32 %v426, %v367
        %v625 = vadd.s32 %v426, %v368
        %v626 = vadd.s32 %v426, %v369
        %v627 = vadd.s32 %v426, %v370
        %v628 = vadd.s32 %v426, %v371
        %v629 = vadd.s32 %v426, %v372
        %v630 = vadd.s32 %v426, %v373
        %v631 = vadd.s32 %v426, %v374
        %v632 = vadd.s32 %v426, %v375
        %v633 = vadd.s32 %v426, %v376
        %v634 = vadd.s32 %v426, %v377
        %v635 = vadd.s32 %v426, %v378
        %v636 = vadd.s32 %v426, %v379
        %v637 = vadd.s32 %v426, %v380
        %v638 = vadd.s32 %v426, %v381
        %v639 = vadd.s32 %v426, %v382
        %v640 = vadd.s32 %v426, %v383
        %v641 = vadd.s32 %v426, %v384
        %v642 = vadd.s32 %v426, %v385
        %v643 = vadd.s32 %v426, %v386
        %v644 = vadd.s32 %v426, %v387
        %v645 = vadd.s32 %v426, %v388
        %v646 = vadd.s32 %v426, %v389
        %v647 = vadd.s32 %v426, %v390
        %v648 = vadd.s32 %v426, %v391
        %v649 = vadd.s32 %v426, %v392
        %v650 = vadd.s32 %v426, %v393
        %v651 = vadd.s32 %v426, %v394
        %v652 = vadd.s32 %v426, %v395
        %v653 = vadd.s32 %v426, %v396
        %v654 = vadd.s32 %v426, %v397
        %v655 = vadd.s32 %v426, %v398
        %v656 = vadd.s32 %v426, %v399
        %v657 = vadd.s32 %v426, %v400
        %v658 = vadd.s32 %v426, %v401
        %v659 = vadd.s32 %v426, %v402
        %v660 = vadd.s32 %v426, %v403
        %v661 = vadd.s32 %v426, %v404
        %v662 = vadd.s32 %v426, %v405
        %v663 = vadd.s32 %v426, %v406
        %v664 = vadd.s32 %v426, %v407
        %v665 = vadd.s32 %v426, %v408
        %v666 = vadd.s32 %v426, %v409
        %v667 = vadd.s32 %v426, %v410
        %v668 = vadd.s32 %v426, %v411
        %v669 = vadd.s32 %v426, %v412
        %v670 = vadd.s32 %v426, %v413
        %v671 = vadd.s32 %v426, %v414
        %v672 = vadd.s32 %v426, %v415
        %v673 = vadd.s32 %v426, %v416
        %v674 = vadd.s32 %v426, %v417
        %v675 = vadd.s32 %v426, %v418
        %v676 = vadd.s32 %v426, %v419
        %v677 = vadd.s32 %v426, %v420
        %v678 = vadd.s32 %v426, %v421
        %v679 = vadd.s32 %v426, %v422
        %v680 = vadd.s32 %v426, %v423
        %v681 = vadd.s32 %v426, %v424
        %v682 = vadd.s32 %v426, %v425
        %vm683 = vcmp.lt.s32.totalorder %v427, 3072
        %vm684 = vcmp.lt.s32.totalorder %v428, 3072
        %vm685 = vcmp.lt.s32.totalorder %v429, 3072
        %vm686 = vcmp.lt.s32.totalorder %v430, 3072
        %vm687 = vcmp.lt.s32.totalorder %v431, 3072
        %vm688 = vcmp.lt.s32.totalorder %v432, 3072
        %vm689 = vcmp.lt.s32.totalorder %v433, 3072
        %vm690 = vcmp.lt.s32.totalorder %v434, 3072
        %vm691 = vcmp.lt.s32.totalorder %v435, 3072
        %vm692 = vcmp.lt.s32.totalorder %v436, 3072
        %vm693 = vcmp.lt.s32.totalorder %v437, 3072
        %vm694 = vcmp.lt.s32.totalorder %v438, 3072
        %vm695 = vcmp.lt.s32.totalorder %v439, 3072
        %vm696 = vcmp.lt.s32.totalorder %v440, 3072
        %vm697 = vcmp.lt.s32.totalorder %v441, 3072
        %vm698 = vcmp.lt.s32.totalorder %v442, 3072
        %vm699 = vcmp.lt.s32.totalorder %v443, 3072
        %vm700 = vcmp.lt.s32.totalorder %v444, 3072
        %vm701 = vcmp.lt.s32.totalorder %v445, 3072
        %vm702 = vcmp.lt.s32.totalorder %v446, 3072
        %vm703 = vcmp.lt.s32.totalorder %v447, 3072
        %vm704 = vcmp.lt.s32.totalorder %v448, 3072
        %vm705 = vcmp.lt.s32.totalorder %v449, 3072
        %vm706 = vcmp.lt.s32.totalorder %v450, 3072
        %vm707 = vcmp.lt.s32.totalorder %v451, 3072
        %vm708 = vcmp.lt.s32.totalorder %v452, 3072
        %vm709 = vcmp.lt.s32.totalorder %v453, 3072
        %vm710 = vcmp.lt.s32.totalorder %v454, 3072
        %vm711 = vcmp.lt.s32.totalorder %v455, 3072
        %vm712 = vcmp.lt.s32.totalorder %v456, 3072
        %vm713 = vcmp.lt.s32.totalorder %v457, 3072
        %vm714 = vcmp.lt.s32.totalorder %v458, 3072
        %vm715 = vcmp.lt.s32.totalorder %v459, 3072
        %vm716 = vcmp.lt.s32.totalorder %v460, 3072
        %vm717 = vcmp.lt.s32.totalorder %v461, 3072
        %vm718 = vcmp.lt.s32.totalorder %v462, 3072
        %vm719 = vcmp.lt.s32.totalorder %v463, 3072
        %vm720 = vcmp.lt.s32.totalorder %v464, 3072
        %vm721 = vcmp.lt.s32.totalorder %v465, 3072
        %vm722 = vcmp.lt.s32.totalorder %v466, 3072
        %vm723 = vcmp.lt.s32.totalorder %v467, 3072
        %vm724 = vcmp.lt.s32.totalorder %v468, 3072
        %vm725 = vcmp.lt.s32.totalorder %v469, 3072
        %vm726 = vcmp.lt.s32.totalorder %v470, 3072
        %vm727 = vcmp.lt.s32.totalorder %v471, 3072
        %vm728 = vcmp.lt.s32.totalorder %v472, 3072
        %vm729 = vcmp.lt.s32.totalorder %v473, 3072
        %vm730 = vcmp.lt.s32.totalorder %v474, 3072
        %vm731 = vcmp.lt.s32.totalorder %v475, 3072
        %vm732 = vcmp.lt.s32.totalorder %v476, 3072
        %vm733 = vcmp.lt.s32.totalorder %v477, 3072
        %vm734 = vcmp.lt.s32.totalorder %v478, 3072
        %vm735 = vcmp.lt.s32.totalorder %v479, 3072
        %vm736 = vcmp.lt.s32.totalorder %v480, 3072
        %vm737 = vcmp.lt.s32.totalorder %v481, 3072
        %vm738 = vcmp.lt.s32.totalorder %v482, 3072
        %vm739 = vcmp.lt.s32.totalorder %v483, 3072
        %vm740 = vcmp.lt.s32.totalorder %v484, 3072
        %vm741 = vcmp.lt.s32.totalorder %v485, 3072
        %vm742 = vcmp.lt.s32.totalorder %v486, 3072
        %vm743 = vcmp.lt.s32.totalorder %v487, 3072
        %vm744 = vcmp.lt.s32.totalorder %v488, 3072
        %vm745 = vcmp.lt.s32.totalorder %v489, 3072
        %vm746 = vcmp.lt.s32.totalorder %v490, 3072
        %vm747 = vcmp.lt.s32.totalorder %v491, 3072
        %vm748 = vcmp.lt.s32.totalorder %v492, 3072
        %vm749 = vcmp.lt.s32.totalorder %v493, 3072
        %vm750 = vcmp.lt.s32.totalorder %v494, 3072
        %vm751 = vcmp.lt.s32.totalorder %v495, 3072
        %vm752 = vcmp.lt.s32.totalorder %v496, 3072
        %vm753 = vcmp.lt.s32.totalorder %v497, 3072
        %vm754 = vcmp.lt.s32.totalorder %v498, 3072
        %vm755 = vcmp.lt.s32.totalorder %v499, 3072
        %vm756 = vcmp.lt.s32.totalorder %v500, 3072
        %vm757 = vcmp.lt.s32.totalorder %v501, 3072
        %vm758 = vcmp.lt.s32.totalorder %v502, 3072
        %vm759 = vcmp.lt.s32.totalorder %v503, 3072
        %vm760 = vcmp.lt.s32.totalorder %v504, 3072
        %vm761 = vcmp.lt.s32.totalorder %v505, 3072
        %vm762 = vcmp.lt.s32.totalorder %v506, 3072
        %vm763 = vcmp.lt.s32.totalorder %v507, 3072
        %vm764 = vcmp.lt.s32.totalorder %v508, 3072
        %vm765 = vcmp.lt.s32.totalorder %v509, 3072
        %vm766 = vcmp.lt.s32.totalorder %v510, 3072
        %vm767 = vcmp.lt.s32.totalorder %v511, 3072
        %vm768 = vcmp.lt.s32.totalorder %v512, 3072
        %vm769 = vcmp.lt.s32.totalorder %v513, 3072
        %vm770 = vcmp.lt.s32.totalorder %v514, 3072
        %vm771 = vcmp.lt.s32.totalorder %v515, 3072
        %vm772 = vcmp.lt.s32.totalorder %v516, 3072
        %vm773 = vcmp.lt.s32.totalorder %v517, 3072
        %vm774 = vcmp.lt.s32.totalorder %v518, 3072
        %vm775 = vcmp.lt.s32.totalorder %v519, 3072
        %vm776 = vcmp.lt.s32.totalorder %v520, 3072
        %vm777 = vcmp.lt.s32.totalorder %v521, 3072
        %vm778 = vcmp.lt.s32.totalorder %v522, 3072
        %vm779 = vcmp.lt.s32.totalorder %v523, 3072
        %vm780 = vcmp.lt.s32.totalorder %v524, 3072
        %vm781 = vcmp.lt.s32.totalorder %v525, 3072
        %vm782 = vcmp.lt.s32.totalorder %v526, 3072
        %vm783 = vcmp.lt.s32.totalorder %v527, 3072
        %vm784 = vcmp.lt.s32.totalorder %v528, 3072
        %vm785 = vcmp.lt.s32.totalorder %v529, 3072
        %vm786 = vcmp.lt.s32.totalorder %v530, 3072
        %vm787 = vcmp.lt.s32.totalorder %v531, 3072
        %vm788 = vcmp.lt.s32.totalorder %v532, 3072
        %vm789 = vcmp.lt.s32.totalorder %v533, 3072
        %vm790 = vcmp.lt.s32.totalorder %v534, 3072
        %vm791 = vcmp.lt.s32.totalorder %v535, 3072
        %vm792 = vcmp.lt.s32.totalorder %v536, 3072
        %vm793 = vcmp.lt.s32.totalorder %v537, 3072
        %vm794 = vcmp.lt.s32.totalorder %v538, 3072
        %vm795 = vcmp.lt.s32.totalorder %v539, 3072
        %vm796 = vcmp.lt.s32.totalorder %v540, 3072
        %vm797 = vcmp.lt.s32.totalorder %v541, 3072
        %vm798 = vcmp.lt.s32.totalorder %v542, 3072
        %vm799 = vcmp.lt.s32.totalorder %v543, 3072
        %vm800 = vcmp.lt.s32.totalorder %v544, 3072
        %vm801 = vcmp.lt.s32.totalorder %v545, 3072
        %vm802 = vcmp.lt.s32.totalorder %v546, 3072
        %vm803 = vcmp.lt.s32.totalorder %v547, 3072
        %vm804 = vcmp.lt.s32.totalorder %v548, 3072
        %vm805 = vcmp.lt.s32.totalorder %v549, 3072
        %vm806 = vcmp.lt.s32.totalorder %v550, 3072
        %vm807 = vcmp.lt.s32.totalorder %v551, 3072
        %vm808 = vcmp.lt.s32.totalorder %v552, 3072
        %vm809 = vcmp.lt.s32.totalorder %v553, 3072
        %vm810 = vcmp.lt.s32.totalorder %v554, 3072
        %vm811 = vcmp.lt.s32.totalorder %v555, 3072
        %vm812 = vcmp.lt.s32.totalorder %v556, 3072
        %vm813 = vcmp.lt.s32.totalorder %v557, 3072
        %vm814 = vcmp.lt.s32.totalorder %v558, 3072
        %vm815 = vcmp.lt.s32.totalorder %v559, 3072
        %vm816 = vcmp.lt.s32.totalorder %v560, 3072
        %vm817 = vcmp.lt.s32.totalorder %v561, 3072
        %vm818 = vcmp.lt.s32.totalorder %v562, 3072
        %vm819 = vcmp.lt.s32.totalorder %v563, 3072
        %vm820 = vcmp.lt.s32.totalorder %v564, 3072
        %vm821 = vcmp.lt.s32.totalorder %v565, 3072
        %vm822 = vcmp.lt.s32.totalorder %v566, 3072
        %vm823 = vcmp.lt.s32.totalorder %v567, 3072
        %vm824 = vcmp.lt.s32.totalorder %v568, 3072
        %vm825 = vcmp.lt.s32.totalorder %v569, 3072
        %vm826 = vcmp.lt.s32.totalorder %v570, 3072
        %vm827 = vcmp.lt.s32.totalorder %v571, 3072
        %vm828 = vcmp.lt.s32.totalorder %v572, 3072
        %vm829 = vcmp.lt.s32.totalorder %v573, 3072
        %vm830 = vcmp.lt.s32.totalorder %v574, 3072
        %vm831 = vcmp.lt.s32.totalorder %v575, 3072
        %vm832 = vcmp.lt.s32.totalorder %v576, 3072
        %vm833 = vcmp.lt.s32.totalorder %v577, 3072
        %vm834 = vcmp.lt.s32.totalorder %v578, 3072
        %vm835 = vcmp.lt.s32.totalorder %v579, 3072
        %vm836 = vcmp.lt.s32.totalorder %v580, 3072
        %vm837 = vcmp.lt.s32.totalorder %v581, 3072
        %vm838 = vcmp.lt.s32.totalorder %v582, 3072
        %vm839 = vcmp.lt.s32.totalorder %v583, 3072
        %vm840 = vcmp.lt.s32.totalorder %v584, 3072
        %vm841 = vcmp.lt.s32.totalorder %v585, 3072
        %vm842 = vcmp.lt.s32.totalorder %v586, 3072
        %vm843 = vcmp.lt.s32.totalorder %v587, 3072
        %vm844 = vcmp.lt.s32.totalorder %v588, 3072
        %vm845 = vcmp.lt.s32.totalorder %v589, 3072
        %vm846 = vcmp.lt.s32.totalorder %v590, 3072
        %vm847 = vcmp.lt.s32.totalorder %v591, 3072
        %vm848 = vcmp.lt.s32.totalorder %v592, 3072
        %vm849 = vcmp.lt.s32.totalorder %v593, 3072
        %vm850 = vcmp.lt.s32.totalorder %v594, 3072
        %vm851 = vcmp.lt.s32.totalorder %v595, 3072
        %vm852 = vcmp.lt.s32.totalorder %v596, 3072
        %vm853 = vcmp.lt.s32.totalorder %v597, 3072
        %vm854 = vcmp.lt.s32.totalorder %v598, 3072
        %vm855 = vcmp.lt.s32.totalorder %v599, 3072
        %vm856 = vcmp.lt.s32.totalorder %v600, 3072
        %vm857 = vcmp.lt.s32.totalorder %v601, 3072
        %vm858 = vcmp.lt.s32.totalorder %v602, 3072
        %vm859 = vcmp.lt.s32.totalorder %v603, 3072
        %vm860 = vcmp.lt.s32.totalorder %v604, 3072
        %vm861 = vcmp.lt.s32.totalorder %v605, 3072
        %vm862 = vcmp.lt.s32.totalorder %v606, 3072
        %vm863 = vcmp.lt.s32.totalorder %v607, 3072
        %vm864 = vcmp.lt.s32.totalorder %v608, 3072
        %vm865 = vcmp.lt.s32.totalorder %v609, 3072
        %vm866 = vcmp.lt.s32.totalorder %v610, 3072
        %vm867 = vcmp.lt.s32.totalorder %v611, 3072
        %vm868 = vcmp.lt.s32.totalorder %v612, 3072
        %vm869 = vcmp.lt.s32.totalorder %v613, 3072
        %vm870 = vcmp.lt.s32.totalorder %v614, 3072
        %vm871 = vcmp.lt.s32.totalorder %v615, 3072
        %vm872 = vcmp.lt.s32.totalorder %v616, 3072
        %vm873 = vcmp.lt.s32.totalorder %v617, 3072
        %vm874 = vcmp.lt.s32.totalorder %v618, 3072
        %vm875 = vcmp.lt.s32.totalorder %v619, 3072
        %vm876 = vcmp.lt.s32.totalorder %v620, 3072
        %vm877 = vcmp.lt.s32.totalorder %v621, 3072
        %vm878 = vcmp.lt.s32.totalorder %v622, 3072
        %vm879 = vcmp.lt.s32.totalorder %v623, 3072
        %vm880 = vcmp.lt.s32.totalorder %v624, 3072
        %vm881 = vcmp.lt.s32.totalorder %v625, 3072
        %vm882 = vcmp.lt.s32.totalorder %v626, 3072
        %vm883 = vcmp.lt.s32.totalorder %v627, 3072
        %vm884 = vcmp.lt.s32.totalorder %v628, 3072
        %vm885 = vcmp.lt.s32.totalorder %v629, 3072
        %vm886 = vcmp.lt.s32.totalorder %v630, 3072
        %vm887 = vcmp.lt.s32.totalorder %v631, 3072
        %vm888 = vcmp.lt.s32.totalorder %v632, 3072
        %vm889 = vcmp.lt.s32.totalorder %v633, 3072
        %vm890 = vcmp.lt.s32.totalorder %v634, 3072
        %vm891 = vcmp.lt.s32.totalorder %v635, 3072
        %vm892 = vcmp.lt.s32.totalorder %v636, 3072
        %vm893 = vcmp.lt.s32.totalorder %v637, 3072
        %vm894 = vcmp.lt.s32.totalorder %v638, 3072
        %vm895 = vcmp.lt.s32.totalorder %v639, 3072
        %vm896 = vcmp.lt.s32.totalorder %v640, 3072
        %vm897 = vcmp.lt.s32.totalorder %v641, 3072
        %vm898 = vcmp.lt.s32.totalorder %v642, 3072
        %vm899 = vcmp.lt.s32.totalorder %v643, 3072
        %vm900 = vcmp.lt.s32.totalorder %v644, 3072
        %vm901 = vcmp.lt.s32.totalorder %v645, 3072
        %vm902 = vcmp.lt.s32.totalorder %v646, 3072
        %vm903 = vcmp.lt.s32.totalorder %v647, 3072
        %vm904 = vcmp.lt.s32.totalorder %v648, 3072
        %vm905 = vcmp.lt.s32.totalorder %v649, 3072
        %vm906 = vcmp.lt.s32.totalorder %v650, 3072
        %vm907 = vcmp.lt.s32.totalorder %v651, 3072
        %vm908 = vcmp.lt.s32.totalorder %v652, 3072
        %vm909 = vcmp.lt.s32.totalorder %v653, 3072
        %vm910 = vcmp.lt.s32.totalorder %v654, 3072
        %vm911 = vcmp.lt.s32.totalorder %v655, 3072
        %vm912 = vcmp.lt.s32.totalorder %v656, 3072
        %vm913 = vcmp.lt.s32.totalorder %v657, 3072
        %vm914 = vcmp.lt.s32.totalorder %v658, 3072
        %vm915 = vcmp.lt.s32.totalorder %v659, 3072
        %vm916 = vcmp.lt.s32.totalorder %v660, 3072
        %vm917 = vcmp.lt.s32.totalorder %v661, 3072
        %vm918 = vcmp.lt.s32.totalorder %v662, 3072
        %vm919 = vcmp.lt.s32.totalorder %v663, 3072
        %vm920 = vcmp.lt.s32.totalorder %v664, 3072
        %vm921 = vcmp.lt.s32.totalorder %v665, 3072
        %vm922 = vcmp.lt.s32.totalorder %v666, 3072
        %vm923 = vcmp.lt.s32.totalorder %v667, 3072
        %vm924 = vcmp.lt.s32.totalorder %v668, 3072
        %vm925 = vcmp.lt.s32.totalorder %v669, 3072
        %vm926 = vcmp.lt.s32.totalorder %v670, 3072
        %vm927 = vcmp.lt.s32.totalorder %v671, 3072
        %vm928 = vcmp.lt.s32.totalorder %v672, 3072
        %vm929 = vcmp.lt.s32.totalorder %v673, 3072
        %vm930 = vcmp.lt.s32.totalorder %v674, 3072
        %vm931 = vcmp.lt.s32.totalorder %v675, 3072
        %vm932 = vcmp.lt.s32.totalorder %v676, 3072
        %vm933 = vcmp.lt.s32.totalorder %v677, 3072
        %vm934 = vcmp.lt.s32.totalorder %v678, 3072
        %vm935 = vcmp.lt.s32.totalorder %v679, 3072
        %vm936 = vcmp.lt.s32.totalorder %v680, 3072
        %vm937 = vcmp.lt.s32.totalorder %v681, 3072
        %vm938 = vcmp.lt.s32.totalorder %v682, 3072
        %v939 = vld [vmem:[%s137] sm:$0xff]
        %v940 = vld [vmem:[%s137 + $0x8] sm:$0xff]
        %v941 = vld [vmem:[%s137 + $0x10] sm:$0xff]
        %v942 = vld [vmem:[%s137 + $0x18] sm:$0xff]
        %v943 = vld [vmem:[%s137 + $0x20] sm:$0xff]
        %v944 = vld [vmem:[%s137 + $0x28] sm:$0xff]
        %v945 = vld [vmem:[%s137 + $0x30] sm:$0xff]
        %v946 = vld [vmem:[%s137 + $0x38] sm:$0xff]
        %v947 = vld [vmem:[%s137 + $0x40] sm:$0xff]
        %v948 = vld [vmem:[%s137 + $0x48] sm:$0xff]
        %v949 = vld [vmem:[%s137 + $0x50] sm:$0xff]
        %v950 = vld [vmem:[%s137 + $0x58] sm:$0xff]
        %v951 = vld [vmem:[%s137 + $0x60] sm:$0xff]
        %v952 = vld [vmem:[%s137 + $0x68] sm:$0xff]
        %v953 = vld [vmem:[%s137 + $0x70] sm:$0xff]
        %v954 = vld [vmem:[%s137 + $0x78] sm:$0xff]
        %v955 = vld [vmem:[%s137 + $0x80] sm:$0xff]
        %v956 = vld [vmem:[%s137 + $0x88] sm:$0xff]
        %v957 = vld [vmem:[%s137 + $0x90] sm:$0xff]
        %v958 = vld [vmem:[%s137 + $0x98] sm:$0xff]
        %v959 = vld [vmem:[%s137 + $0xa0] sm:$0xff]
        %v960 = vld [vmem:[%s137 + $0xa8] sm:$0xff]
        %v961 = vld [vmem:[%s137 + $0xb0] sm:$0xff]
        %v962 = vld [vmem:[%s137 + $0xb8] sm:$0xff]
        %v963 = vld [vmem:[%s137 + $0xc0] sm:$0xff]
        %v964 = vld [vmem:[%s137 + $0xc8] sm:$0xff]
        %v965 = vld [vmem:[%s137 + $0xd0] sm:$0xff]
        %v966 = vld [vmem:[%s137 + $0xd8] sm:$0xff]
        %v967 = vld [vmem:[%s137 + $0xe0] sm:$0xff]
        %v968 = vld [vmem:[%s137 + $0xe8] sm:$0xff]
        %v969 = vld [vmem:[%s137 + $0xf0] sm:$0xff]
        %v970 = vld [vmem:[%s137 + $0xf8] sm:$0xff]
        %v971 = vld [vmem:[%s137 + $0x100] sm:$0xff]
        %v972 = vld [vmem:[%s137 + $0x108] sm:$0xff]
        %v973 = vld [vmem:[%s137 + $0x110] sm:$0xff]
        %v974 = vld [vmem:[%s137 + $0x118] sm:$0xff]
        %v975 = vld [vmem:[%s137 + $0x120] sm:$0xff]
        %v976 = vld [vmem:[%s137 + $0x128] sm:$0xff]
        %v977 = vld [vmem:[%s137 + $0x130] sm:$0xff]
        %v978 = vld [vmem:[%s137 + $0x138] sm:$0xff]
        %v979 = vld [vmem:[%s137 + $0x140] sm:$0xff]
        %v980 = vld [vmem:[%s137 + $0x148] sm:$0xff]
        %v981 = vld [vmem:[%s137 + $0x150] sm:$0xff]
        %v982 = vld [vmem:[%s137 + $0x158] sm:$0xff]
        %v983 = vld [vmem:[%s137 + $0x160] sm:$0xff]
        %v984 = vld [vmem:[%s137 + $0x168] sm:$0xff]
        %v985 = vld [vmem:[%s137 + $0x170] sm:$0xff]
        %v986 = vld [vmem:[%s137 + $0x178] sm:$0xff]
        %v987 = vld [vmem:[%s137 + $0x180] sm:$0xff]
        %v988 = vld [vmem:[%s137 + $0x188] sm:$0xff]
        %v989 = vld [vmem:[%s137 + $0x190] sm:$0xff]
        %v990 = vld [vmem:[%s137 + $0x198] sm:$0xff]
        %v991 = vld [vmem:[%s137 + $0x1a0] sm:$0xff]
        %v992 = vld [vmem:[%s137 + $0x1a8] sm:$0xff]
        %v993 = vld [vmem:[%s137 + $0x1b0] sm:$0xff]
        %v994 = vld [vmem:[%s137 + $0x1b8] sm:$0xff]
        %v995 = vld [vmem:[%s137 + $0x1c0] sm:$0xff]
        %v996 = vld [vmem:[%s137 + $0x1c8] sm:$0xff]
        %v997 = vld [vmem:[%s137 + $0x1d0] sm:$0xff]
        %v998 = vld [vmem:[%s137 + $0x1d8] sm:$0xff]
        %v999 = vld [vmem:[%s137 + $0x1e0] sm:$0xff]
        %v1000 = vld [vmem:[%s137 + $0x1e8] sm:$0xff]
        %v1001 = vld [vmem:[%s137 + $0x1f0] sm:$0xff]
        %v1002 = vld [vmem:[%s137 + $0x1f8] sm:$0xff]
        %v1003 = vld [vmem:[%s137 + $0x200] sm:$0xff]
        %v1004 = vld [vmem:[%s137 + $0x208] sm:$0xff]
        %v1005 = vld [vmem:[%s137 + $0x210] sm:$0xff]
        %v1006 = vld [vmem:[%s137 + $0x218] sm:$0xff]
        %v1007 = vld [vmem:[%s137 + $0x220] sm:$0xff]
        %v1008 = vld [vmem:[%s137 + $0x228] sm:$0xff]
        %v1009 = vld [vmem:[%s137 + $0x230] sm:$0xff]
        %v1010 = vld [vmem:[%s137 + $0x238] sm:$0xff]
        %v1011 = vld [vmem:[%s137 + $0x240] sm:$0xff]
        %v1012 = vld [vmem:[%s137 + $0x248] sm:$0xff]
        %v1013 = vld [vmem:[%s137 + $0x250] sm:$0xff]
        %v1014 = vld [vmem:[%s137 + $0x258] sm:$0xff]
        %v1015 = vld [vmem:[%s137 + $0x260] sm:$0xff]
        %v1016 = vld [vmem:[%s137 + $0x268] sm:$0xff]
        %v1017 = vld [vmem:[%s137 + $0x270] sm:$0xff]
        %v1018 = vld [vmem:[%s137 + $0x278] sm:$0xff]
        %v1019 = vld [vmem:[%s137 + $0x280] sm:$0xff]
        %v1020 = vld [vmem:[%s137 + $0x288] sm:$0xff]
        %v1021 = vld [vmem:[%s137 + $0x290] sm:$0xff]
        %v1022 = vld [vmem:[%s137 + $0x298] sm:$0xff]
        %v1023 = vld [vmem:[%s137 + $0x2a0] sm:$0xff]
        %v1024 = vld [vmem:[%s137 + $0x2a8] sm:$0xff]
        %v1025 = vld [vmem:[%s137 + $0x2b0] sm:$0xff]
        %v1026 = vld [vmem:[%s137 + $0x2b8] sm:$0xff]
        %v1027 = vld [vmem:[%s137 + $0x2c0] sm:$0xff]
        %v1028 = vld [vmem:[%s137 + $0x2c8] sm:$0xff]
        %v1029 = vld [vmem:[%s137 + $0x2d0] sm:$0xff]
        %v1030 = vld [vmem:[%s137 + $0x2d8] sm:$0xff]
        %v1031 = vld [vmem:[%s137 + $0x2e0] sm:$0xff]
        %v1032 = vld [vmem:[%s137 + $0x2e8] sm:$0xff]
        %v1033 = vld [vmem:[%s137 + $0x2f0] sm:$0xff]
        %v1034 = vld [vmem:[%s137 + $0x2f8] sm:$0xff]
        %v1035 = vld [vmem:[%s137 + $0x300] sm:$0xff]
        %v1036 = vld [vmem:[%s137 + $0x308] sm:$0xff]
        %v1037 = vld [vmem:[%s137 + $0x310] sm:$0xff]
        %v1038 = vld [vmem:[%s137 + $0x318] sm:$0xff]
        %v1039 = vld [vmem:[%s137 + $0x320] sm:$0xff]
        %v1040 = vld [vmem:[%s137 + $0x328] sm:$0xff]
        %v1041 = vld [vmem:[%s137 + $0x330] sm:$0xff]
        %v1042 = vld [vmem:[%s137 + $0x338] sm:$0xff]
        %v1043 = vld [vmem:[%s137 + $0x340] sm:$0xff]
        %v1044 = vld [vmem:[%s137 + $0x348] sm:$0xff]
        %v1045 = vld [vmem:[%s137 + $0x350] sm:$0xff]
        %v1046 = vld [vmem:[%s137 + $0x358] sm:$0xff]
        %v1047 = vld [vmem:[%s137 + $0x360] sm:$0xff]
        %v1048 = vld [vmem:[%s137 + $0x368] sm:$0xff]
        %v1049 = vld [vmem:[%s137 + $0x370] sm:$0xff]
        %v1050 = vld [vmem:[%s137 + $0x378] sm:$0xff]
        %v1051 = vld [vmem:[%s137 + $0x380] sm:$0xff]
        %v1052 = vld [vmem:[%s137 + $0x388] sm:$0xff]
        %v1053 = vld [vmem:[%s137 + $0x390] sm:$0xff]
        %v1054 = vld [vmem:[%s137 + $0x398] sm:$0xff]
        %v1055 = vld [vmem:[%s137 + $0x3a0] sm:$0xff]
        %v1056 = vld [vmem:[%s137 + $0x3a8] sm:$0xff]
        %v1057 = vld [vmem:[%s137 + $0x3b0] sm:$0xff]
        %v1058 = vld [vmem:[%s137 + $0x3b8] sm:$0xff]
        %v1059 = vld [vmem:[%s137 + $0x3c0] sm:$0xff]
        %v1060 = vld [vmem:[%s137 + $0x3c8] sm:$0xff]
        %v1061 = vld [vmem:[%s137 + $0x3d0] sm:$0xff]
        %v1062 = vld [vmem:[%s137 + $0x3d8] sm:$0xff]
        %v1063 = vld [vmem:[%s137 + $0x3e0] sm:$0xff]
        %v1064 = vld [vmem:[%s137 + $0x3e8] sm:$0xff]
        %v1065 = vld [vmem:[%s137 + $0x3f0] sm:$0xff]
        %v1066 = vld [vmem:[%s137 + $0x3f8] sm:$0xff]
        %v1067 = vld [vmem:[%s137 + $0x400] sm:$0xff]
        %v1068 = vld [vmem:[%s137 + $0x408] sm:$0xff]
        %v1069 = vld [vmem:[%s137 + $0x410] sm:$0xff]
        %v1070 = vld [vmem:[%s137 + $0x418] sm:$0xff]
        %v1071 = vld [vmem:[%s137 + $0x420] sm:$0xff]
        %v1072 = vld [vmem:[%s137 + $0x428] sm:$0xff]
        %v1073 = vld [vmem:[%s137 + $0x430] sm:$0xff]
        %v1074 = vld [vmem:[%s137 + $0x438] sm:$0xff]
        %v1075 = vld [vmem:[%s137 + $0x440] sm:$0xff]
        %v1076 = vld [vmem:[%s137 + $0x448] sm:$0xff]
        %v1077 = vld [vmem:[%s137 + $0x450] sm:$0xff]
        %v1078 = vld [vmem:[%s137 + $0x458] sm:$0xff]
        %v1079 = vld [vmem:[%s137 + $0x460] sm:$0xff]
        %v1080 = vld [vmem:[%s137 + $0x468] sm:$0xff]
        %v1081 = vld [vmem:[%s137 + $0x470] sm:$0xff]
        %v1082 = vld [vmem:[%s137 + $0x478] sm:$0xff]
        %v1083 = vld [vmem:[%s137 + $0x480] sm:$0xff]
        %v1084 = vld [vmem:[%s137 + $0x488] sm:$0xff]
        %v1085 = vld [vmem:[%s137 + $0x490] sm:$0xff]
        %v1086 = vld [vmem:[%s137 + $0x498] sm:$0xff]
        %v1087 = vld [vmem:[%s137 + $0x4a0] sm:$0xff]
        %v1088 = vld [vmem:[%s137 + $0x4a8] sm:$0xff]
        %v1089 = vld [vmem:[%s137 + $0x4b0] sm:$0xff]
        %v1090 = vld [vmem:[%s137 + $0x4b8] sm:$0xff]
        %v1091 = vld [vmem:[%s137 + $0x4c0] sm:$0xff]
        %v1092 = vld [vmem:[%s137 + $0x4c8] sm:$0xff]
        %v1093 = vld [vmem:[%s137 + $0x4d0] sm:$0xff]
        %v1094 = vld [vmem:[%s137 + $0x4d8] sm:$0xff]
        %v1095 = vld [vmem:[%s137 + $0x4e0] sm:$0xff]
        %v1096 = vld [vmem:[%s137 + $0x4e8] sm:$0xff]
        %v1097 = vld [vmem:[%s137 + $0x4f0] sm:$0xff]
        %v1098 = vld [vmem:[%s137 + $0x4f8] sm:$0xff]
        %v1099 = vld [vmem:[%s137 + $0x500] sm:$0xff]
        %v1100 = vld [vmem:[%s137 + $0x508] sm:$0xff]
        %v1101 = vld [vmem:[%s137 + $0x510] sm:$0xff]
        %v1102 = vld [vmem:[%s137 + $0x518] sm:$0xff]
        %v1103 = vld [vmem:[%s137 + $0x520] sm:$0xff]
        %v1104 = vld [vmem:[%s137 + $0x528] sm:$0xff]
        %v1105 = vld [vmem:[%s137 + $0x530] sm:$0xff]
        %v1106 = vld [vmem:[%s137 + $0x538] sm:$0xff]
        %v1107 = vld [vmem:[%s137 + $0x540] sm:$0xff]
        %v1108 = vld [vmem:[%s137 + $0x548] sm:$0xff]
        %v1109 = vld [vmem:[%s137 + $0x550] sm:$0xff]
        %v1110 = vld [vmem:[%s137 + $0x558] sm:$0xff]
        %v1111 = vld [vmem:[%s137 + $0x560] sm:$0xff]
        %v1112 = vld [vmem:[%s137 + $0x568] sm:$0xff]
        %v1113 = vld [vmem:[%s137 + $0x570] sm:$0xff]
        %v1114 = vld [vmem:[%s137 + $0x578] sm:$0xff]
        %v1115 = vld [vmem:[%s137 + $0x580] sm:$0xff]
        %v1116 = vld [vmem:[%s137 + $0x588] sm:$0xff]
        %v1117 = vld [vmem:[%s137 + $0x590] sm:$0xff]
        %v1118 = vld [vmem:[%s137 + $0x598] sm:$0xff]
        %v1119 = vld [vmem:[%s137 + $0x5a0] sm:$0xff]
        %v1120 = vld [vmem:[%s137 + $0x5a8] sm:$0xff]
        %v1121 = vld [vmem:[%s137 + $0x5b0] sm:$0xff]
        %v1122 = vld [vmem:[%s137 + $0x5b8] sm:$0xff]
        %v1123 = vld [vmem:[%s137 + $0x5c0] sm:$0xff]
        %v1124 = vld [vmem:[%s137 + $0x5c8] sm:$0xff]
        %v1125 = vld [vmem:[%s137 + $0x5d0] sm:$0xff]
        %v1126 = vld [vmem:[%s137 + $0x5d8] sm:$0xff]
        %v1127 = vld [vmem:[%s137 + $0x5e0] sm:$0xff]
        %v1128 = vld [vmem:[%s137 + $0x5e8] sm:$0xff]
        %v1129 = vld [vmem:[%s137 + $0x5f0] sm:$0xff]
        %v1130 = vld [vmem:[%s137 + $0x5f8] sm:$0xff]
        %v1131 = vld [vmem:[%s137 + $0x600] sm:$0xff]
        %v1132 = vld [vmem:[%s137 + $0x608] sm:$0xff]
        %v1133 = vld [vmem:[%s137 + $0x610] sm:$0xff]
        %v1134 = vld [vmem:[%s137 + $0x618] sm:$0xff]
        %v1135 = vld [vmem:[%s137 + $0x620] sm:$0xff]
        %v1136 = vld [vmem:[%s137 + $0x628] sm:$0xff]
        %v1137 = vld [vmem:[%s137 + $0x630] sm:$0xff]
        %v1138 = vld [vmem:[%s137 + $0x638] sm:$0xff]
        %v1139 = vld [vmem:[%s137 + $0x640] sm:$0xff]
        %v1140 = vld [vmem:[%s137 + $0x648] sm:$0xff]
        %v1141 = vld [vmem:[%s137 + $0x650] sm:$0xff]
        %v1142 = vld [vmem:[%s137 + $0x658] sm:$0xff]
        %v1143 = vld [vmem:[%s137 + $0x660] sm:$0xff]
        %v1144 = vld [vmem:[%s137 + $0x668] sm:$0xff]
        %v1145 = vld [vmem:[%s137 + $0x670] sm:$0xff]
        %v1146 = vld [vmem:[%s137 + $0x678] sm:$0xff]
        %v1147 = vld [vmem:[%s137 + $0x680] sm:$0xff]
        %v1148 = vld [vmem:[%s137 + $0x688] sm:$0xff]
        %v1149 = vld [vmem:[%s137 + $0x690] sm:$0xff]
        %v1150 = vld [vmem:[%s137 + $0x698] sm:$0xff]
        %v1151 = vld [vmem:[%s137 + $0x6a0] sm:$0xff]
        %v1152 = vld [vmem:[%s137 + $0x6a8] sm:$0xff]
        %v1153 = vld [vmem:[%s137 + $0x6b0] sm:$0xff]
        %v1154 = vld [vmem:[%s137 + $0x6b8] sm:$0xff]
        %v1155 = vld [vmem:[%s137 + $0x6c0] sm:$0xff]
        %v1156 = vld [vmem:[%s137 + $0x6c8] sm:$0xff]
        %v1157 = vld [vmem:[%s137 + $0x6d0] sm:$0xff]
        %v1158 = vld [vmem:[%s137 + $0x6d8] sm:$0xff]
        %v1159 = vld [vmem:[%s137 + $0x6e0] sm:$0xff]
        %v1160 = vld [vmem:[%s137 + $0x6e8] sm:$0xff]
        %v1161 = vld [vmem:[%s137 + $0x6f0] sm:$0xff]
        %v1162 = vld [vmem:[%s137 + $0x6f8] sm:$0xff]
        %v1163 = vld [vmem:[%s137 + $0x700] sm:$0xff]
        %v1164 = vld [vmem:[%s137 + $0x708] sm:$0xff]
        %v1165 = vld [vmem:[%s137 + $0x710] sm:$0xff]
        %v1166 = vld [vmem:[%s137 + $0x718] sm:$0xff]
        %v1167 = vld [vmem:[%s137 + $0x720] sm:$0xff]
        %v1168 = vld [vmem:[%s137 + $0x728] sm:$0xff]
        %v1169 = vld [vmem:[%s137 + $0x730] sm:$0xff]
        %v1170 = vld [vmem:[%s137 + $0x738] sm:$0xff]
        %v1171 = vld [vmem:[%s137 + $0x740] sm:$0xff]
        %v1172 = vld [vmem:[%s137 + $0x748] sm:$0xff]
        %v1173 = vld [vmem:[%s137 + $0x750] sm:$0xff]
        %v1174 = vld [vmem:[%s137 + $0x758] sm:$0xff]
        %v1175 = vld [vmem:[%s137 + $0x760] sm:$0xff]
        %v1176 = vld [vmem:[%s137 + $0x768] sm:$0xff]
        %v1177 = vld [vmem:[%s137 + $0x770] sm:$0xff]
        %v1178 = vld [vmem:[%s137 + $0x778] sm:$0xff]
        %v1179 = vld [vmem:[%s137 + $0x780] sm:$0xff]
        %v1180 = vld [vmem:[%s137 + $0x788] sm:$0xff]
        %v1181 = vld [vmem:[%s137 + $0x790] sm:$0xff]
        %v1182 = vld [vmem:[%s137 + $0x798] sm:$0xff]
        %v1183 = vld [vmem:[%s137 + $0x7a0] sm:$0xff]
        %v1184 = vld [vmem:[%s137 + $0x7a8] sm:$0xff]
        %v1185 = vld [vmem:[%s137 + $0x7b0] sm:$0xff]
        %v1186 = vld [vmem:[%s137 + $0x7b8] sm:$0xff]
        %v1187 = vld [vmem:[%s137 + $0x7c0] sm:$0xff]
        %v1188 = vld [vmem:[%s137 + $0x7c8] sm:$0xff]
        %v1189 = vld [vmem:[%s137 + $0x7d0] sm:$0xff]
        %v1190 = vld [vmem:[%s137 + $0x7d8] sm:$0xff]
        %v1191 = vld [vmem:[%s137 + $0x7e0] sm:$0xff]
        %v1192 = vld [vmem:[%s137 + $0x7e8] sm:$0xff]
        %v1193 = vld [vmem:[%s137 + $0x7f0] sm:$0xff]
        %v1194 = vld [vmem:[%s137 + $0x7f8] sm:$0xff]
        %v1195 = vsel %vm683, %v939, 1.0
        %v1196 = vsel %vm684, %v940, 1.0
        %v1197 = vsel %vm685, %v941, 1.0
        %v1198 = vsel %vm686, %v942, 1.0
        %v1199 = vsel %vm687, %v943, 1.0
        %v1200 = vsel %vm688, %v944, 1.0
        %v1201 = vsel %vm689, %v945, 1.0
        %v1202 = vsel %vm690, %v946, 1.0
        %v1203 = vsel %vm691, %v947, 1.0
        %v1204 = vsel %vm692, %v948, 1.0
        %v1205 = vsel %vm693, %v949, 1.0
        %v1206 = vsel %vm694, %v950, 1.0
        %v1207 = vsel %vm695, %v951, 1.0
        %v1208 = vsel %vm696, %v952, 1.0
        %v1209 = vsel %vm697, %v953, 1.0
        %v1210 = vsel %vm698, %v954, 1.0
        %v1211 = vsel %vm699, %v955, 1.0
        %v1212 = vsel %vm700, %v956, 1.0
        %v1213 = vsel %vm701, %v957, 1.0
        %v1214 = vsel %vm702, %v958, 1.0
        %v1215 = vsel %vm703, %v959, 1.0
        %v1216 = vsel %vm704, %v960, 1.0
        %v1217 = vsel %vm705, %v961, 1.0
        %v1218 = vsel %vm706, %v962, 1.0
        %v1219 = vsel %vm707, %v963, 1.0
        %v1220 = vsel %vm708, %v964, 1.0
        %v1221 = vsel %vm709, %v965, 1.0
        %v1222 = vsel %vm710, %v966, 1.0
        %v1223 = vsel %vm711, %v967, 1.0
        %v1224 = vsel %vm712, %v968, 1.0
        %v1225 = vsel %vm713, %v969, 1.0
        %v1226 = vsel %vm714, %v970, 1.0
        %v1227 = vsel %vm715, %v971, 1.0
        %v1228 = vsel %vm716, %v972, 1.0
        %v1229 = vsel %vm717, %v973, 1.0
        %v1230 = vsel %vm718, %v974, 1.0
        %v1231 = vsel %vm719, %v975, 1.0
        %v1232 = vsel %vm720, %v976, 1.0
        %v1233 = vsel %vm721, %v977, 1.0
        %v1234 = vsel %vm722, %v978, 1.0
        %v1235 = vsel %vm723, %v979, 1.0
        %v1236 = vsel %vm724, %v980, 1.0
        %v1237 = vsel %vm725, %v981, 1.0
        %v1238 = vsel %vm726, %v982, 1.0
        %v1239 = vsel %vm727, %v983, 1.0
        %v1240 = vsel %vm728, %v984, 1.0
        %v1241 = vsel %vm729, %v985, 1.0
        %v1242 = vsel %vm730, %v986, 1.0
        %v1243 = vsel %vm731, %v987, 1.0
        %v1244 = vsel %vm732, %v988, 1.0
        %v1245 = vsel %vm733, %v989, 1.0
        %v1246 = vsel %vm734, %v990, 1.0
        %v1247 = vsel %vm735, %v991, 1.0
        %v1248 = vsel %vm736, %v992, 1.0
        %v1249 = vsel %vm737, %v993, 1.0
        %v1250 = vsel %vm738, %v994, 1.0
        %v1251 = vsel %vm739, %v995, 1.0
        %v1252 = vsel %vm740, %v996, 1.0
        %v1253 = vsel %vm741, %v997, 1.0
        %v1254 = vsel %vm742, %v998, 1.0
        %v1255 = vsel %vm743, %v999, 1.0
        %v1256 = vsel %vm744, %v1000, 1.0
        %v1257 = vsel %vm745, %v1001, 1.0
        %v1258 = vsel %vm746, %v1002, 1.0
        %v1259 = vsel %vm747, %v1003, 1.0
        %v1260 = vsel %vm748, %v1004, 1.0
        %v1261 = vsel %vm749, %v1005, 1.0
        %v1262 = vsel %vm750, %v1006, 1.0
        %v1263 = vsel %vm751, %v1007, 1.0
        %v1264 = vsel %vm752, %v1008, 1.0
        %v1265 = vsel %vm753, %v1009, 1.0
        %v1266 = vsel %vm754, %v1010, 1.0
        %v1267 = vsel %vm755, %v1011, 1.0
        %v1268 = vsel %vm756, %v1012, 1.0
        %v1269 = vsel %vm757, %v1013, 1.0
        %v1270 = vsel %vm758, %v1014, 1.0
        %v1271 = vsel %vm759, %v1015, 1.0
        %v1272 = vsel %vm760, %v1016, 1.0
        %v1273 = vsel %vm761, %v1017, 1.0
        %v1274 = vsel %vm762, %v1018, 1.0
        %v1275 = vsel %vm763, %v1019, 1.0
        %v1276 = vsel %vm764, %v1020, 1.0
        %v1277 = vsel %vm765, %v1021, 1.0
        %v1278 = vsel %vm766, %v1022, 1.0
        %v1279 = vsel %vm767, %v1023, 1.0
        %v1280 = vsel %vm768, %v1024, 1.0
        %v1281 = vsel %vm769, %v1025, 1.0
        %v1282 = vsel %vm770, %v1026, 1.0
        %v1283 = vsel %vm771, %v1027, 1.0
        %v1284 = vsel %vm772, %v1028, 1.0
        %v1285 = vsel %vm773, %v1029, 1.0
        %v1286 = vsel %vm774, %v1030, 1.0
        %v1287 = vsel %vm775, %v1031, 1.0
        %v1288 = vsel %vm776, %v1032, 1.0
        %v1289 = vsel %vm777, %v1033, 1.0
        %v1290 = vsel %vm778, %v1034, 1.0
        %v1291 = vsel %vm779, %v1035, 1.0
        %v1292 = vsel %vm780, %v1036, 1.0
        %v1293 = vsel %vm781, %v1037, 1.0
        %v1294 = vsel %vm782, %v1038, 1.0
        %v1295 = vsel %vm783, %v1039, 1.0
        %v1296 = vsel %vm784, %v1040, 1.0
        %v1297 = vsel %vm785, %v1041, 1.0
        %v1298 = vsel %vm786, %v1042, 1.0
        %v1299 = vsel %vm787, %v1043, 1.0
        %v1300 = vsel %vm788, %v1044, 1.0
        %v1301 = vsel %vm789, %v1045, 1.0
        %v1302 = vsel %vm790, %v1046, 1.0
        %v1303 = vsel %vm791, %v1047, 1.0
        %v1304 = vsel %vm792, %v1048, 1.0
        %v1305 = vsel %vm793, %v1049, 1.0
        %v1306 = vsel %vm794, %v1050, 1.0
        %v1307 = vsel %vm795, %v1051, 1.0
        %v1308 = vsel %vm796, %v1052, 1.0
        %v1309 = vsel %vm797, %v1053, 1.0
        %v1310 = vsel %vm798, %v1054, 1.0
        %v1311 = vsel %vm799, %v1055, 1.0
        %v1312 = vsel %vm800, %v1056, 1.0
        %v1313 = vsel %vm801, %v1057, 1.0
        %v1314 = vsel %vm802, %v1058, 1.0
        %v1315 = vsel %vm803, %v1059, 1.0
        %v1316 = vsel %vm804, %v1060, 1.0
        %v1317 = vsel %vm805, %v1061, 1.0
        %v1318 = vsel %vm806, %v1062, 1.0
        %v1319 = vsel %vm807, %v1063, 1.0
        %v1320 = vsel %vm808, %v1064, 1.0
        %v1321 = vsel %vm809, %v1065, 1.0
        %v1322 = vsel %vm810, %v1066, 1.0
        %v1323 = vsel %vm811, %v1067, 1.0
        %v1324 = vsel %vm812, %v1068, 1.0
        %v1325 = vsel %vm813, %v1069, 1.0
        %v1326 = vsel %vm814, %v1070, 1.0
        %v1327 = vsel %vm815, %v1071, 1.0
        %v1328 = vsel %vm816, %v1072, 1.0
        %v1329 = vsel %vm817, %v1073, 1.0
        %v1330 = vsel %vm818, %v1074, 1.0
        %v1331 = vsel %vm819, %v1075, 1.0
        %v1332 = vsel %vm820, %v1076, 1.0
        %v1333 = vsel %vm821, %v1077, 1.0
        %v1334 = vsel %vm822, %v1078, 1.0
        %v1335 = vsel %vm823, %v1079, 1.0
        %v1336 = vsel %vm824, %v1080, 1.0
        %v1337 = vsel %vm825, %v1081, 1.0
        %v1338 = vsel %vm826, %v1082, 1.0
        %v1339 = vsel %vm827, %v1083, 1.0
        %v1340 = vsel %vm828, %v1084, 1.0
        %v1341 = vsel %vm829, %v1085, 1.0
        %v1342 = vsel %vm830, %v1086, 1.0
        %v1343 = vsel %vm831, %v1087, 1.0
        %v1344 = vsel %vm832, %v1088, 1.0
        %v1345 = vsel %vm833, %v1089, 1.0
        %v1346 = vsel %vm834, %v1090, 1.0
        %v1347 = vsel %vm835, %v1091, 1.0
        %v1348 = vsel %vm836, %v1092, 1.0
        %v1349 = vsel %vm837, %v1093, 1.0
        %v1350 = vsel %vm838, %v1094, 1.0
        %v1351 = vsel %vm839, %v1095, 1.0
        %v1352 = vsel %vm840, %v1096, 1.0
        %v1353 = vsel %vm841, %v1097, 1.0
        %v1354 = vsel %vm842, %v1098, 1.0
        %v1355 = vsel %vm843, %v1099, 1.0
        %v1356 = vsel %vm844, %v1100, 1.0
        %v1357 = vsel %vm845, %v1101, 1.0
        %v1358 = vsel %vm846, %v1102, 1.0
        %v1359 = vsel %vm847, %v1103, 1.0
        %v1360 = vsel %vm848, %v1104, 1.0
        %v1361 = vsel %vm849, %v1105, 1.0
        %v1362 = vsel %vm850, %v1106, 1.0
        %v1363 = vsel %vm851, %v1107, 1.0
        %v1364 = vsel %vm852, %v1108, 1.0
        %v1365 = vsel %vm853, %v1109, 1.0
        %v1366 = vsel %vm854, %v1110, 1.0
        %v1367 = vsel %vm855, %v1111, 1.0
        %v1368 = vsel %vm856, %v1112, 1.0
        %v1369 = vsel %vm857, %v1113, 1.0
        %v1370 = vsel %vm858, %v1114, 1.0
        %v1371 = vsel %vm859, %v1115, 1.0
        %v1372 = vsel %vm860, %v1116, 1.0
        %v1373 = vsel %vm861, %v1117, 1.0
        %v1374 = vsel %vm862, %v1118, 1.0
        %v1375 = vsel %vm863, %v1119, 1.0
        %v1376 = vsel %vm864, %v1120, 1.0
        %v1377 = vsel %vm865, %v1121, 1.0
        %v1378 = vsel %vm866, %v1122, 1.0
        %v1379 = vsel %vm867, %v1123, 1.0
        %v1380 = vsel %vm868, %v1124, 1.0
        %v1381 = vsel %vm869, %v1125, 1.0
        %v1382 = vsel %vm870, %v1126, 1.0
        %v1383 = vsel %vm871, %v1127, 1.0
        %v1384 = vsel %vm872, %v1128, 1.0
        %v1385 = vsel %vm873, %v1129, 1.0
        %v1386 = vsel %vm874, %v1130, 1.0
        %v1387 = vsel %vm875, %v1131, 1.0
        %v1388 = vsel %vm876, %v1132, 1.0
        %v1389 = vsel %vm877, %v1133, 1.0
        %v1390 = vsel %vm878, %v1134, 1.0
        %v1391 = vsel %vm879, %v1135, 1.0
        %v1392 = vsel %vm880, %v1136, 1.0
        %v1393 = vsel %vm881, %v1137, 1.0
        %v1394 = vsel %vm882, %v1138, 1.0
        %v1395 = vsel %vm883, %v1139, 1.0
        %v1396 = vsel %vm884, %v1140, 1.0
        %v1397 = vsel %vm885, %v1141, 1.0
        %v1398 = vsel %vm886, %v1142, 1.0
        %v1399 = vsel %vm887, %v1143, 1.0
        %v1400 = vsel %vm888, %v1144, 1.0
        %v1401 = vsel %vm889, %v1145, 1.0
        %v1402 = vsel %vm890, %v1146, 1.0
        %v1403 = vsel %vm891, %v1147, 1.0
        %v1404 = vsel %vm892, %v1148, 1.0
        %v1405 = vsel %vm893, %v1149, 1.0
        %v1406 = vsel %vm894, %v1150, 1.0
        %v1407 = vsel %vm895, %v1151, 1.0
        %v1408 = vsel %vm896, %v1152, 1.0
        %v1409 = vsel %vm897, %v1153, 1.0
        %v1410 = vsel %vm898, %v1154, 1.0
        %v1411 = vsel %vm899, %v1155, 1.0
        %v1412 = vsel %vm900, %v1156, 1.0
        %v1413 = vsel %vm901, %v1157, 1.0
        %v1414 = vsel %vm902, %v1158, 1.0
        %v1415 = vsel %vm903, %v1159, 1.0
        %v1416 = vsel %vm904, %v1160, 1.0
        %v1417 = vsel %vm905, %v1161, 1.0
        %v1418 = vsel %vm906, %v1162, 1.0
        %v1419 = vsel %vm907, %v1163, 1.0
        %v1420 = vsel %vm908, %v1164, 1.0
        %v1421 = vsel %vm909, %v1165, 1.0
        %v1422 = vsel %vm910, %v1166, 1.0
        %v1423 = vsel %vm911, %v1167, 1.0
        %v1424 = vsel %vm912, %v1168, 1.0
        %v1425 = vsel %vm913, %v1169, 1.0
        %v1426 = vsel %vm914, %v1170, 1.0
        %v1427 = vsel %vm915, %v1171, 1.0
        %v1428 = vsel %vm916, %v1172, 1.0
        %v1429 = vsel %vm917, %v1173, 1.0
        %v1430 = vsel %vm918, %v1174, 1.0
        %v1431 = vsel %vm919, %v1175, 1.0
        %v1432 = vsel %vm920, %v1176, 1.0
        %v1433 = vsel %vm921, %v1177, 1.0
        %v1434 = vsel %vm922, %v1178, 1.0
        %v1435 = vsel %vm923, %v1179, 1.0
        %v1436 = vsel %vm924, %v1180, 1.0
        %v1437 = vsel %vm925, %v1181, 1.0
        %v1438 = vsel %vm926, %v1182, 1.0
        %v1439 = vsel %vm927, %v1183, 1.0
        %v1440 = vsel %vm928, %v1184, 1.0
        %v1441 = vsel %vm929, %v1185, 1.0
        %v1442 = vsel %vm930, %v1186, 1.0
        %v1443 = vsel %vm931, %v1187, 1.0
        %v1444 = vsel %vm932, %v1188, 1.0
        %v1445 = vsel %vm933, %v1189, 1.0
        %v1446 = vsel %vm934, %v1190, 1.0
        %v1447 = vsel %vm935, %v1191, 1.0
        %v1448 = vsel %vm936, %v1192, 1.0
        %v1449 = vsel %vm937, %v1193, 1.0
        %v1450 = vsel %vm938, %v1194, 1.0
        %v1451 = vlog2.pop %v1195
        %v1452 = vmul.f32 %v1451, 0.6931472
        %v1453 = vlog2.pop %v1196
        %v1454 = vmul.f32 %v1453, 0.6931472
        %v1455 = vlog2.pop %v1197
        %v1456 = vmul.f32 %v1455, 0.6931472
        %v1457 = vlog2.pop %v1198
        %v1458 = vmul.f32 %v1457, 0.6931472
        %v1459 = vlog2.pop %v1199
        %v1460 = vmul.f32 %v1459, 0.6931472
        %v1461 = vlog2.pop %v1200
        %v1462 = vmul.f32 %v1461, 0.6931472
        %v1463 = vlog2.pop %v1201
        %v1464 = vmul.f32 %v1463, 0.6931472
        %v1465 = vlog2.pop %v1202
        %v1466 = vmul.f32 %v1465, 0.6931472
        %v1467 = vlog2.pop %v1203
        %v1468 = vmul.f32 %v1467, 0.6931472
        %v1469 = vlog2.pop %v1204
        %v1470 = vmul.f32 %v1469, 0.6931472
        %v1471 = vlog2.pop %v1205
        %v1472 = vmul.f32 %v1471, 0.6931472
        %v1473 = vlog2.pop %v1206
        %v1474 = vmul.f32 %v1473, 0.6931472
        %v1475 = vlog2.pop %v1207
        %v1476 = vmul.f32 %v1475, 0.6931472
        %v1477 = vlog2.pop %v1208
        %v1478 = vmul.f32 %v1477, 0.6931472
        %v1479 = vlog2.pop %v1209
        %v1480 = vmul.f32 %v1479, 0.6931472
        %v1481 = vlog2.pop %v1210
        %v1482 = vmul.f32 %v1481, 0.6931472
        %v1483 = vlog2.pop %v1211
        %v1484 = vmul.f32 %v1483, 0.6931472
        %v1485 = vlog2.pop %v1212
        %v1486 = vmul.f32 %v1485, 0.6931472
        %v1487 = vlog2.pop %v1213
        %v1488 = vmul.f32 %v1487, 0.6931472
        %v1489 = vlog2.pop %v1214
        %v1490 = vmul.f32 %v1489, 0.6931472
        %v1491 = vlog2.pop %v1215
        %v1492 = vmul.f32 %v1491, 0.6931472
        %v1493 = vlog2.pop %v1216
        %v1494 = vmul.f32 %v1493, 0.6931472
        %v1495 = vlog2.pop %v1217
        %v1496 = vmul.f32 %v1495, 0.6931472
        %v1497 = vlog2.pop %v1218
        %v1498 = vmul.f32 %v1497, 0.6931472
        %v1499 = vlog2.pop %v1219
        %v1500 = vmul.f32 %v1499, 0.6931472
        %v1501 = vlog2.pop %v1220
        %v1502 = vmul.f32 %v1501, 0.6931472
        %v1503 = vlog2.pop %v1221
        %v1504 = vmul.f32 %v1503, 0.6931472
        %v1505 = vlog2.pop %v1222
        %v1506 = vmul.f32 %v1505, 0.6931472
        %v1507 = vlog2.pop %v1223
        %v1508 = vmul.f32 %v1507, 0.6931472
        %v1509 = vlog2.pop %v1224
        %v1510 = vmul.f32 %v1509, 0.6931472
        %v1511 = vlog2.pop %v1225
        %v1512 = vmul.f32 %v1511, 0.6931472
        %v1513 = vlog2.pop %v1226
        %v1514 = vmul.f32 %v1513, 0.6931472
        %v1515 = vlog2.pop %v1227
        %v1516 = vmul.f32 %v1515, 0.6931472
        %v1517 = vlog2.pop %v1228
        %v1518 = vmul.f32 %v1517, 0.6931472
        %v1519 = vlog2.pop %v1229
        %v1520 = vmul.f32 %v1519, 0.6931472
        %v1521 = vlog2.pop %v1230
        %v1522 = vmul.f32 %v1521, 0.6931472
        %v1523 = vlog2.pop %v1231
        %v1524 = vmul.f32 %v1523, 0.6931472
        %v1525 = vlog2.pop %v1232
        %v1526 = vmul.f32 %v1525, 0.6931472
        %v1527 = vlog2.pop %v1233
        %v1528 = vmul.f32 %v1527, 0.6931472
        %v1529 = vlog2.pop %v1234
        %v1530 = vmul.f32 %v1529, 0.6931472
        %v1531 = vlog2.pop %v1235
        %v1532 = vmul.f32 %v1531, 0.6931472
        %v1533 = vlog2.pop %v1236
        %v1534 = vmul.f32 %v1533, 0.6931472
        %v1535 = vlog2.pop %v1237
        %v1536 = vmul.f32 %v1535, 0.6931472
        %v1537 = vlog2.pop %v1238
        %v1538 = vmul.f32 %v1537, 0.6931472
        %v1539 = vlog2.pop %v1239
        %v1540 = vmul.f32 %v1539, 0.6931472
        %v1541 = vlog2.pop %v1240
        %v1542 = vmul.f32 %v1541, 0.6931472
        %v1543 = vlog2.pop %v1241
        %v1544 = vmul.f32 %v1543, 0.6931472
        %v1545 = vlog2.pop %v1242
        %v1546 = vmul.f32 %v1545, 0.6931472
        %v1547 = vlog2.pop %v1243
        %v1548 = vmul.f32 %v1547, 0.6931472
        %v1549 = vlog2.pop %v1244
        %v1550 = vmul.f32 %v1549, 0.6931472
        %v1551 = vlog2.pop %v1245
        %v1552 = vmul.f32 %v1551, 0.6931472
        %v1553 = vlog2.pop %v1246
        %v1554 = vmul.f32 %v1553, 0.6931472
        %v1555 = vlog2.pop %v1247
        %v1556 = vmul.f32 %v1555, 0.6931472
        %v1557 = vlog2.pop %v1248
        %v1558 = vmul.f32 %v1557, 0.6931472
        %v1559 = vlog2.pop %v1249
        %v1560 = vmul.f32 %v1559, 0.6931472
        %v1561 = vlog2.pop %v1250
        %v1562 = vmul.f32 %v1561, 0.6931472
        %v1563 = vlog2.pop %v1251
        %v1564 = vmul.f32 %v1563, 0.6931472
        %v1565 = vlog2.pop %v1252
        %v1566 = vmul.f32 %v1565, 0.6931472
        %v1567 = vlog2.pop %v1253
        %v1568 = vmul.f32 %v1567, 0.6931472
        %v1569 = vlog2.pop %v1254
        %v1570 = vmul.f32 %v1569, 0.6931472
        %v1571 = vlog2.pop %v1255
        %v1572 = vmul.f32 %v1571, 0.6931472
        %v1573 = vlog2.pop %v1256
        %v1574 = vmul.f32 %v1573, 0.6931472
        %v1575 = vlog2.pop %v1257
        %v1576 = vmul.f32 %v1575, 0.6931472
        %v1577 = vlog2.pop %v1258
        %v1578 = vmul.f32 %v1577, 0.6931472
        %v1579 = vlog2.pop %v1259
        %v1580 = vmul.f32 %v1579, 0.6931472
        %v1581 = vlog2.pop %v1260
        %v1582 = vmul.f32 %v1581, 0.6931472
        %v1583 = vlog2.pop %v1261
        %v1584 = vmul.f32 %v1583, 0.6931472
        %v1585 = vlog2.pop %v1262
        %v1586 = vmul.f32 %v1585, 0.6931472
        %v1587 = vlog2.pop %v1263
        %v1588 = vmul.f32 %v1587, 0.6931472
        %v1589 = vlog2.pop %v1264
        %v1590 = vmul.f32 %v1589, 0.6931472
        %v1591 = vlog2.pop %v1265
        %v1592 = vmul.f32 %v1591, 0.6931472
        %v1593 = vlog2.pop %v1266
        %v1594 = vmul.f32 %v1593, 0.6931472
        %v1595 = vlog2.pop %v1267
        %v1596 = vmul.f32 %v1595, 0.6931472
        %v1597 = vlog2.pop %v1268
        %v1598 = vmul.f32 %v1597, 0.6931472
        %v1599 = vlog2.pop %v1269
        %v1600 = vmul.f32 %v1599, 0.6931472
        %v1601 = vlog2.pop %v1270
        %v1602 = vmul.f32 %v1601, 0.6931472
        %v1603 = vlog2.pop %v1271
        %v1604 = vmul.f32 %v1603, 0.6931472
        %v1605 = vlog2.pop %v1272
        %v1606 = vmul.f32 %v1605, 0.6931472
        %v1607 = vlog2.pop %v1273
        %v1608 = vmul.f32 %v1607, 0.6931472
        %v1609 = vlog2.pop %v1274
        %v1610 = vmul.f32 %v1609, 0.6931472
        %v1611 = vlog2.pop %v1275
        %v1612 = vmul.f32 %v1611, 0.6931472
        %v1613 = vlog2.pop %v1276
        %v1614 = vmul.f32 %v1613, 0.6931472
        %v1615 = vlog2.pop %v1277
        %v1616 = vmul.f32 %v1615, 0.6931472
        %v1617 = vlog2.pop %v1278
        %v1618 = vmul.f32 %v1617, 0.6931472
        %v1619 = vlog2.pop %v1279
        %v1620 = vmul.f32 %v1619, 0.6931472
        %v1621 = vlog2.pop %v1280
        %v1622 = vmul.f32 %v1621, 0.6931472
        %v1623 = vlog2.pop %v1281
        %v1624 = vmul.f32 %v1623, 0.6931472
        %v1625 = vlog2.pop %v1282
        %v1626 = vmul.f32 %v1625, 0.6931472
        %v1627 = vlog2.pop %v1283
        %v1628 = vmul.f32 %v1627, 0.6931472
        %v1629 = vlog2.pop %v1284
        %v1630 = vmul.f32 %v1629, 0.6931472
        %v1631 = vlog2.pop %v1285
        %v1632 = vmul.f32 %v1631, 0.6931472
        %v1633 = vlog2.pop %v1286
        %v1634 = vmul.f32 %v1633, 0.6931472
        %v1635 = vlog2.pop %v1287
        %v1636 = vmul.f32 %v1635, 0.6931472
        %v1637 = vlog2.pop %v1288
        %v1638 = vmul.f32 %v1637, 0.6931472
        %v1639 = vlog2.pop %v1289
        %v1640 = vmul.f32 %v1639, 0.6931472
        %v1641 = vlog2.pop %v1290
        %v1642 = vmul.f32 %v1641, 0.6931472
        %v1643 = vlog2.pop %v1291
        %v1644 = vmul.f32 %v1643, 0.6931472
        %v1645 = vlog2.pop %v1292
        %v1646 = vmul.f32 %v1645, 0.6931472
        %v1647 = vlog2.pop %v1293
        %v1648 = vmul.f32 %v1647, 0.6931472
        %v1649 = vlog2.pop %v1294
        %v1650 = vmul.f32 %v1649, 0.6931472
        %v1651 = vlog2.pop %v1295
        %v1652 = vmul.f32 %v1651, 0.6931472
        %v1653 = vlog2.pop %v1296
        %v1654 = vmul.f32 %v1653, 0.6931472
        %v1655 = vlog2.pop %v1297
        %v1656 = vmul.f32 %v1655, 0.6931472
        %v1657 = vlog2.pop %v1298
        %v1658 = vmul.f32 %v1657, 0.6931472
        %v1659 = vlog2.pop %v1299
        %v1660 = vmul.f32 %v1659, 0.6931472
        %v1661 = vlog2.pop %v1300
        %v1662 = vmul.f32 %v1661, 0.6931472
        %v1663 = vlog2.pop %v1301
        %v1664 = vmul.f32 %v1663, 0.6931472
        %v1665 = vlog2.pop %v1302
        %v1666 = vmul.f32 %v1665, 0.6931472
        %v1667 = vlog2.pop %v1303
        %v1668 = vmul.f32 %v1667, 0.6931472
        %v1669 = vlog2.pop %v1304
        %v1670 = vmul.f32 %v1669, 0.6931472
        %v1671 = vlog2.pop %v1305
        %v1672 = vmul.f32 %v1671, 0.6931472
        %v1673 = vlog2.pop %v1306
        %v1674 = vmul.f32 %v1673, 0.6931472
        %v1675 = vlog2.pop %v1307
        %v1676 = vmul.f32 %v1675, 0.6931472
        %v1677 = vlog2.pop %v1308
        %v1678 = vmul.f32 %v1677, 0.6931472
        %v1679 = vlog2.pop %v1309
        %v1680 = vmul.f32 %v1679, 0.6931472
        %v1681 = vlog2.pop %v1310
        %v1682 = vmul.f32 %v1681, 0.6931472
        %v1683 = vlog2.pop %v1311
        %v1684 = vmul.f32 %v1683, 0.6931472
        %v1685 = vlog2.pop %v1312
        %v1686 = vmul.f32 %v1685, 0.6931472
        %v1687 = vlog2.pop %v1313
        %v1688 = vmul.f32 %v1687, 0.6931472
        %v1689 = vlog2.pop %v1314
        %v1690 = vmul.f32 %v1689, 0.6931472
        %v1691 = vlog2.pop %v1315
        %v1692 = vmul.f32 %v1691, 0.6931472
        %v1693 = vlog2.pop %v1316
        %v1694 = vmul.f32 %v1693, 0.6931472
        %v1695 = vlog2.pop %v1317
        %v1696 = vmul.f32 %v1695, 0.6931472
        %v1697 = vlog2.pop %v1318
        %v1698 = vmul.f32 %v1697, 0.6931472
        %v1699 = vlog2.pop %v1319
        %v1700 = vmul.f32 %v1699, 0.6931472
        %v1701 = vlog2.pop %v1320
        %v1702 = vmul.f32 %v1701, 0.6931472
        %v1703 = vlog2.pop %v1321
        %v1704 = vmul.f32 %v1703, 0.6931472
        %v1705 = vlog2.pop %v1322
        %v1706 = vmul.f32 %v1705, 0.6931472
        %v1707 = vlog2.pop %v1323
        %v1708 = vmul.f32 %v1707, 0.6931472
        %v1709 = vlog2.pop %v1324
        %v1710 = vmul.f32 %v1709, 0.6931472
        %v1711 = vlog2.pop %v1325
        %v1712 = vmul.f32 %v1711, 0.6931472
        %v1713 = vlog2.pop %v1326
        %v1714 = vmul.f32 %v1713, 0.6931472
        %v1715 = vlog2.pop %v1327
        %v1716 = vmul.f32 %v1715, 0.6931472
        %v1717 = vlog2.pop %v1328
        %v1718 = vmul.f32 %v1717, 0.6931472
        %v1719 = vlog2.pop %v1329
        %v1720 = vmul.f32 %v1719, 0.6931472
        %v1721 = vlog2.pop %v1330
        %v1722 = vmul.f32 %v1721, 0.6931472
        %v1723 = vlog2.pop %v1331
        %v1724 = vmul.f32 %v1723, 0.6931472
        %v1725 = vlog2.pop %v1332
        %v1726 = vmul.f32 %v1725, 0.6931472
        %v1727 = vlog2.pop %v1333
        %v1728 = vmul.f32 %v1727, 0.6931472
        %v1729 = vlog2.pop %v1334
        %v1730 = vmul.f32 %v1729, 0.6931472
        %v1731 = vlog2.pop %v1335
        %v1732 = vmul.f32 %v1731, 0.6931472
        %v1733 = vlog2.pop %v1336
        %v1734 = vmul.f32 %v1733, 0.6931472
        %v1735 = vlog2.pop %v1337
        %v1736 = vmul.f32 %v1735, 0.6931472
        %v1737 = vlog2.pop %v1338
        %v1738 = vmul.f32 %v1737, 0.6931472
        %v1739 = vlog2.pop %v1339
        %v1740 = vmul.f32 %v1739, 0.6931472
        %v1741 = vlog2.pop %v1340
        %v1742 = vmul.f32 %v1741, 0.6931472
        %v1743 = vlog2.pop %v1341
        %v1744 = vmul.f32 %v1743, 0.6931472
        %v1745 = vlog2.pop %v1342
        %v1746 = vmul.f32 %v1745, 0.6931472
        %v1747 = vlog2.pop %v1343
        %v1748 = vmul.f32 %v1747, 0.6931472
        %v1749 = vlog2.pop %v1344
        %v1750 = vmul.f32 %v1749, 0.6931472
        %v1751 = vlog2.pop %v1345
        %v1752 = vmul.f32 %v1751, 0.6931472
        %v1753 = vlog2.pop %v1346
        %v1754 = vmul.f32 %v1753, 0.6931472
        %v1755 = vlog2.pop %v1347
        %v1756 = vmul.f32 %v1755, 0.6931472
        %v1757 = vlog2.pop %v1348
        %v1758 = vmul.f32 %v1757, 0.6931472
        %v1759 = vlog2.pop %v1349
        %v1760 = vmul.f32 %v1759, 0.6931472
        %v1761 = vlog2.pop %v1350
        %v1762 = vmul.f32 %v1761, 0.6931472
        %v1763 = vlog2.pop %v1351
        %v1764 = vmul.f32 %v1763, 0.6931472
        %v1765 = vlog2.pop %v1352
        %v1766 = vmul.f32 %v1765, 0.6931472
        %v1767 = vlog2.pop %v1353
        %v1768 = vmul.f32 %v1767, 0.6931472
        %v1769 = vlog2.pop %v1354
        %v1770 = vmul.f32 %v1769, 0.6931472
        %v1771 = vlog2.pop %v1355
        %v1772 = vmul.f32 %v1771, 0.6931472
        %v1773 = vlog2.pop %v1356
        %v1774 = vmul.f32 %v1773, 0.6931472
        %v1775 = vlog2.pop %v1357
        %v1776 = vmul.f32 %v1775, 0.6931472
        %v1777 = vlog2.pop %v1358
        %v1778 = vmul.f32 %v1777, 0.6931472
        %v1779 = vlog2.pop %v1359
        %v1780 = vmul.f32 %v1779, 0.6931472
        %v1781 = vlog2.pop %v1360
        %v1782 = vmul.f32 %v1781, 0.6931472
        %v1783 = vlog2.pop %v1361
        %v1784 = vmul.f32 %v1783, 0.6931472
        %v1785 = vlog2.pop %v1362
        %v1786 = vmul.f32 %v1785, 0.6931472
        %v1787 = vlog2.pop %v1363
        %v1788 = vmul.f32 %v1787, 0.6931472
        %v1789 = vlog2.pop %v1364
        %v1790 = vmul.f32 %v1789, 0.6931472
        %v1791 = vlog2.pop %v1365
        %v1792 = vmul.f32 %v1791, 0.6931472
        %v1793 = vlog2.pop %v1366
        %v1794 = vmul.f32 %v1793, 0.6931472
        %v1795 = vlog2.pop %v1367
        %v1796 = vmul.f32 %v1795, 0.6931472
        %v1797 = vlog2.pop %v1368
        %v1798 = vmul.f32 %v1797, 0.6931472
        %v1799 = vlog2.pop %v1369
        %v1800 = vmul.f32 %v1799, 0.6931472
        %v1801 = vlog2.pop %v1370
        %v1802 = vmul.f32 %v1801, 0.6931472
        %v1803 = vlog2.pop %v1371
        %v1804 = vmul.f32 %v1803, 0.6931472
        %v1805 = vlog2.pop %v1372
        %v1806 = vmul.f32 %v1805, 0.6931472
        %v1807 = vlog2.pop %v1373
        %v1808 = vmul.f32 %v1807, 0.6931472
        %v1809 = vlog2.pop %v1374
        %v1810 = vmul.f32 %v1809, 0.6931472
        %v1811 = vlog2.pop %v1375
        %v1812 = vmul.f32 %v1811, 0.6931472
        %v1813 = vlog2.pop %v1376
        %v1814 = vmul.f32 %v1813, 0.6931472
        %v1815 = vlog2.pop %v1377
        %v1816 = vmul.f32 %v1815, 0.6931472
        %v1817 = vlog2.pop %v1378
        %v1818 = vmul.f32 %v1817, 0.6931472
        %v1819 = vlog2.pop %v1379
        %v1820 = vmul.f32 %v1819, 0.6931472
        %v1821 = vlog2.pop %v1380
        %v1822 = vmul.f32 %v1821, 0.6931472
        %v1823 = vlog2.pop %v1381
        %v1824 = vmul.f32 %v1823, 0.6931472
        %v1825 = vlog2.pop %v1382
        %v1826 = vmul.f32 %v1825, 0.6931472
        %v1827 = vlog2.pop %v1383
        %v1828 = vmul.f32 %v1827, 0.6931472
        %v1829 = vlog2.pop %v1384
        %v1830 = vmul.f32 %v1829, 0.6931472
        %v1831 = vlog2.pop %v1385
        %v1832 = vmul.f32 %v1831, 0.6931472
        %v1833 = vlog2.pop %v1386
        %v1834 = vmul.f32 %v1833, 0.6931472
        %v1835 = vlog2.pop %v1387
        %v1836 = vmul.f32 %v1835, 0.6931472
        %v1837 = vlog2.pop %v1388
        %v1838 = vmul.f32 %v1837, 0.6931472
        %v1839 = vlog2.pop %v1389
        %v1840 = vmul.f32 %v1839, 0.6931472
        %v1841 = vlog2.pop %v1390
        %v1842 = vmul.f32 %v1841, 0.6931472
        %v1843 = vlog2.pop %v1391
        %v1844 = vmul.f32 %v1843, 0.6931472
        %v1845 = vlog2.pop %v1392
        %v1846 = vmul.f32 %v1845, 0.6931472
        %v1847 = vlog2.pop %v1393
        %v1848 = vmul.f32 %v1847, 0.6931472
        %v1849 = vlog2.pop %v1394
        %v1850 = vmul.f32 %v1849, 0.6931472
        %v1851 = vlog2.pop %v1395
        %v1852 = vmul.f32 %v1851, 0.6931472
        %v1853 = vlog2.pop %v1396
        %v1854 = vmul.f32 %v1853, 0.6931472
        %v1855 = vlog2.pop %v1397
        %v1856 = vmul.f32 %v1855, 0.6931472
        %v1857 = vlog2.pop %v1398
        %v1858 = vmul.f32 %v1857, 0.6931472
        %v1859 = vlog2.pop %v1399
        %v1860 = vmul.f32 %v1859, 0.6931472
        %v1861 = vlog2.pop %v1400
        %v1862 = vmul.f32 %v1861, 0.6931472
        %v1863 = vlog2.pop %v1401
        %v1864 = vmul.f32 %v1863, 0.6931472
        %v1865 = vlog2.pop %v1402
        %v1866 = vmul.f32 %v1865, 0.6931472
        %v1867 = vlog2.pop %v1403
        %v1868 = vmul.f32 %v1867, 0.6931472
        %v1869 = vlog2.pop %v1404
        %v1870 = vmul.f32 %v1869, 0.6931472
        %v1871 = vlog2.pop %v1405
        %v1872 = vmul.f32 %v1871, 0.6931472
        %v1873 = vlog2.pop %v1406
        %v1874 = vmul.f32 %v1873, 0.6931472
        %v1875 = vlog2.pop %v1407
        %v1876 = vmul.f32 %v1875, 0.6931472
        %v1877 = vlog2.pop %v1408
        %v1878 = vmul.f32 %v1877, 0.6931472
        %v1879 = vlog2.pop %v1409
        %v1880 = vmul.f32 %v1879, 0.6931472
        %v1881 = vlog2.pop %v1410
        %v1882 = vmul.f32 %v1881, 0.6931472
        %v1883 = vlog2.pop %v1411
        %v1884 = vmul.f32 %v1883, 0.6931472
        %v1885 = vlog2.pop %v1412
        %v1886 = vmul.f32 %v1885, 0.6931472
        %v1887 = vlog2.pop %v1413
        %v1888 = vmul.f32 %v1887, 0.6931472
        %v1889 = vlog2.pop %v1414
        %v1890 = vmul.f32 %v1889, 0.6931472
        %v1891 = vlog2.pop %v1415
        %v1892 = vmul.f32 %v1891, 0.6931472
        %v1893 = vlog2.pop %v1416
        %v1894 = vmul.f32 %v1893, 0.6931472
        %v1895 = vlog2.pop %v1417
        %v1896 = vmul.f32 %v1895, 0.6931472
        %v1897 = vlog2.pop %v1418
        %v1898 = vmul.f32 %v1897, 0.6931472
        %v1899 = vlog2.pop %v1419
        %v1900 = vmul.f32 %v1899, 0.6931472
        %v1901 = vlog2.pop %v1420
        %v1902 = vmul.f32 %v1901, 0.6931472
        %v1903 = vlog2.pop %v1421
        %v1904 = vmul.f32 %v1903, 0.6931472
        %v1905 = vlog2.pop %v1422
        %v1906 = vmul.f32 %v1905, 0.6931472
        %v1907 = vlog2.pop %v1423
        %v1908 = vmul.f32 %v1907, 0.6931472
        %v1909 = vlog2.pop %v1424
        %v1910 = vmul.f32 %v1909, 0.6931472
        %v1911 = vlog2.pop %v1425
        %v1912 = vmul.f32 %v1911, 0.6931472
        %v1913 = vlog2.pop %v1426
        %v1914 = vmul.f32 %v1913, 0.6931472
        %v1915 = vlog2.pop %v1427
        %v1916 = vmul.f32 %v1915, 0.6931472
        %v1917 = vlog2.pop %v1428
        %v1918 = vmul.f32 %v1917, 0.6931472
        %v1919 = vlog2.pop %v1429
        %v1920 = vmul.f32 %v1919, 0.6931472
        %v1921 = vlog2.pop %v1430
        %v1922 = vmul.f32 %v1921, 0.6931472
        %v1923 = vlog2.pop %v1431
        %v1924 = vmul.f32 %v1923, 0.6931472
        %v1925 = vlog2.pop %v1432
        %v1926 = vmul.f32 %v1925, 0.6931472
        %v1927 = vlog2.pop %v1433
        %v1928 = vmul.f32 %v1927, 0.6931472
        %v1929 = vlog2.pop %v1434
        %v1930 = vmul.f32 %v1929, 0.6931472
        %v1931 = vlog2.pop %v1435
        %v1932 = vmul.f32 %v1931, 0.6931472
        %v1933 = vlog2.pop %v1436
        %v1934 = vmul.f32 %v1933, 0.6931472
        %v1935 = vlog2.pop %v1437
        %v1936 = vmul.f32 %v1935, 0.6931472
        %v1937 = vlog2.pop %v1438
        %v1938 = vmul.f32 %v1937, 0.6931472
        %v1939 = vlog2.pop %v1439
        %v1940 = vmul.f32 %v1939, 0.6931472
        %v1941 = vlog2.pop %v1440
        %v1942 = vmul.f32 %v1941, 0.6931472
        %v1943 = vlog2.pop %v1441
        %v1944 = vmul.f32 %v1943, 0.6931472
        %v1945 = vlog2.pop %v1442
        %v1946 = vmul.f32 %v1945, 0.6931472
        %v1947 = vlog2.pop %v1443
        %v1948 = vmul.f32 %v1947, 0.6931472
        %v1949 = vlog2.pop %v1444
        %v1950 = vmul.f32 %v1949, 0.6931472
        %v1951 = vlog2.pop %v1445
        %v1952 = vmul.f32 %v1951, 0.6931472
        %v1953 = vlog2.pop %v1446
        %v1954 = vmul.f32 %v1953, 0.6931472
        %v1955 = vlog2.pop %v1447
        %v1956 = vmul.f32 %v1955, 0.6931472
        %v1957 = vlog2.pop %v1448
        %v1958 = vmul.f32 %v1957, 0.6931472
        %v1959 = vlog2.pop %v1449
        %v1960 = vmul.f32 %v1959, 0.6931472
        %v1961 = vlog2.pop %v1450
        %v1962 = vmul.f32 %v1961, 0.6931472
        %v1963 = vld [vmem:[%s155] sm:$0xff]
        %v1964 = vadd.f32 %v1452, %v1454
        %v1965 = vadd.f32 %v1964, %v1456
        %v1966 = vadd.f32 %v1965, %v1458
        %v1967 = vadd.f32 %v1966, %v1460
        %v1968 = vadd.f32 %v1967, %v1462
        %v1969 = vadd.f32 %v1968, %v1464
        %v1970 = vadd.f32 %v1969, %v1466
        %v1971 = vadd.f32 %v1970, %v1468
        %v1972 = vadd.f32 %v1971, %v1470
        %v1973 = vadd.f32 %v1972, %v1472
        %v1974 = vadd.f32 %v1973, %v1474
        %v1975 = vadd.f32 %v1974, %v1476
        %v1976 = vadd.f32 %v1975, %v1478
        %v1977 = vadd.f32 %v1976, %v1480
        %v1978 = vadd.f32 %v1977, %v1482
        %v1979 = vadd.f32 %v1978, %v1484
        %v1980 = vadd.f32 %v1979, %v1486
        %v1981 = vadd.f32 %v1980, %v1488
        %v1982 = vadd.f32 %v1981, %v1490
        %v1983 = vadd.f32 %v1982, %v1492
        %v1984 = vadd.f32 %v1983, %v1494
        %v1985 = vadd.f32 %v1984, %v1496
        %v1986 = vadd.f32 %v1985, %v1498
        %v1987 = vadd.f32 %v1986, %v1500
        %v1988 = vadd.f32 %v1987, %v1502
        %v1989 = vadd.f32 %v1988, %v1504
        %v1990 = vadd.f32 %v1989, %v1506
        %v1991 = vadd.f32 %v1990, %v1508
        %v1992 = vadd.f32 %v1991, %v1510
        %v1993 = vadd.f32 %v1992, %v1512
        %v1994 = vadd.f32 %v1993, %v1514
        %v1995 = vadd.f32 %v1994, %v1516
        %v1996 = vadd.f32 %v1995, %v1518
        %v1997 = vadd.f32 %v1996, %v1520
        %v1998 = vadd.f32 %v1997, %v1522
        %v1999 = vadd.f32 %v1998, %v1524
        %v2000 = vadd.f32 %v1999, %v1526
        %v2001 = vadd.f32 %v2000, %v1528
        %v2002 = vadd.f32 %v2001, %v1530
        %v2003 = vadd.f32 %v2002, %v1532
        %v2004 = vadd.f32 %v2003, %v1534
        %v2005 = vadd.f32 %v2004, %v1536
        %v2006 = vadd.f32 %v2005, %v1538
        %v2007 = vadd.f32 %v2006, %v1540
        %v2008 = vadd.f32 %v2007, %v1542
        %v2009 = vadd.f32 %v2008, %v1544
        %v2010 = vadd.f32 %v2009, %v1546
        %v2011 = vadd.f32 %v2010, %v1548
        %v2012 = vadd.f32 %v2011, %v1550
        %v2013 = vadd.f32 %v2012, %v1552
        %v2014 = vadd.f32 %v2013, %v1554
        %v2015 = vadd.f32 %v2014, %v1556
        %v2016 = vadd.f32 %v2015, %v1558
        %v2017 = vadd.f32 %v2016, %v1560
        %v2018 = vadd.f32 %v2017, %v1562
        %v2019 = vadd.f32 %v2018, %v1564
        %v2020 = vadd.f32 %v2019, %v1566
        %v2021 = vadd.f32 %v2020, %v1568
        %v2022 = vadd.f32 %v2021, %v1570
        %v2023 = vadd.f32 %v2022, %v1572
        %v2024 = vadd.f32 %v2023, %v1574
        %v2025 = vadd.f32 %v2024, %v1576
        %v2026 = vadd.f32 %v2025, %v1578
        %v2027 = vadd.f32 %v2026, %v1580
        %v2028 = vadd.f32 %v2027, %v1582
        %v2029 = vadd.f32 %v2028, %v1584
        %v2030 = vadd.f32 %v2029, %v1586
        %v2031 = vadd.f32 %v2030, %v1588
        %v2032 = vadd.f32 %v2031, %v1590
        %v2033 = vadd.f32 %v2032, %v1592
        %v2034 = vadd.f32 %v2033, %v1594
        %v2035 = vadd.f32 %v2034, %v1596
        %v2036 = vadd.f32 %v2035, %v1598
        %v2037 = vadd.f32 %v2036, %v1600
        %v2038 = vadd.f32 %v2037, %v1602
        %v2039 = vadd.f32 %v2038, %v1604
        %v2040 = vadd.f32 %v2039, %v1606
        %v2041 = vadd.f32 %v2040, %v1608
        %v2042 = vadd.f32 %v2041, %v1610
        %v2043 = vadd.f32 %v2042, %v1612
        %v2044 = vadd.f32 %v2043, %v1614
        %v2045 = vadd.f32 %v2044, %v1616
        %v2046 = vadd.f32 %v2045, %v1618
        %v2047 = vadd.f32 %v2046, %v1620
        %v2048 = vadd.f32 %v2047, %v1622
        %v2049 = vadd.f32 %v2048, %v1624
        %v2050 = vadd.f32 %v2049, %v1626
        %v2051 = vadd.f32 %v2050, %v1628
        %v2052 = vadd.f32 %v2051, %v1630
        %v2053 = vadd.f32 %v2052, %v1632
        %v2054 = vadd.f32 %v2053, %v1634
        %v2055 = vadd.f32 %v2054, %v1636
        %v2056 = vadd.f32 %v2055, %v1638
        %v2057 = vadd.f32 %v2056, %v1640
        %v2058 = vadd.f32 %v2057, %v1642
        %v2059 = vadd.f32 %v2058, %v1644
        %v2060 = vadd.f32 %v2059, %v1646
        %v2061 = vadd.f32 %v2060, %v1648
        %v2062 = vadd.f32 %v2061, %v1650
        %v2063 = vadd.f32 %v2062, %v1652
        %v2064 = vadd.f32 %v2063, %v1654
        %v2065 = vadd.f32 %v2064, %v1656
        %v2066 = vadd.f32 %v2065, %v1658
        %v2067 = vadd.f32 %v2066, %v1660
        %v2068 = vadd.f32 %v2067, %v1662
        %v2069 = vadd.f32 %v2068, %v1664
        %v2070 = vadd.f32 %v2069, %v1666
        %v2071 = vadd.f32 %v2070, %v1668
        %v2072 = vadd.f32 %v2071, %v1670
        %v2073 = vadd.f32 %v2072, %v1672
        %v2074 = vadd.f32 %v2073, %v1674
        %v2075 = vadd.f32 %v2074, %v1676
        %v2076 = vadd.f32 %v2075, %v1678
        %v2077 = vadd.f32 %v2076, %v1680
        %v2078 = vadd.f32 %v2077, %v1682
        %v2079 = vadd.f32 %v2078, %v1684
        %v2080 = vadd.f32 %v2079, %v1686
        %v2081 = vadd.f32 %v2080, %v1688
        %v2082 = vadd.f32 %v2081, %v1690
        %v2083 = vadd.f32 %v2082, %v1692
        %v2084 = vadd.f32 %v2083, %v1694
        %v2085 = vadd.f32 %v2084, %v1696
        %v2086 = vadd.f32 %v2085, %v1698
        %v2087 = vadd.f32 %v2086, %v1700
        %v2088 = vadd.f32 %v2087, %v1702
        %v2089 = vadd.f32 %v2088, %v1704
        %v2090 = vadd.f32 %v2089, %v1706
        %v2091 = vadd.f32 %v2090, %v1708
        %v2092 = vadd.f32 %v2091, %v1710
        %v2093 = vadd.f32 %v2092, %v1712
        %v2094 = vadd.f32 %v2093, %v1714
        %v2095 = vadd.f32 %v2094, %v1716
        %v2096 = vadd.f32 %v2095, %v1718
        %v2097 = vadd.f32 %v2096, %v1720
        %v2098 = vadd.f32 %v2097, %v1722
        %v2099 = vadd.f32 %v2098, %v1724
        %v2100 = vadd.f32 %v2099, %v1726
        %v2101 = vadd.f32 %v2100, %v1728
        %v2102 = vadd.f32 %v2101, %v1730
        %v2103 = vadd.f32 %v2102, %v1732
        %v2104 = vadd.f32 %v2103, %v1734
        %v2105 = vadd.f32 %v2104, %v1736
        %v2106 = vadd.f32 %v2105, %v1738
        %v2107 = vadd.f32 %v2106, %v1740
        %v2108 = vadd.f32 %v2107, %v1742
        %v2109 = vadd.f32 %v2108, %v1744
        %v2110 = vadd.f32 %v2109, %v1746
        %v2111 = vadd.f32 %v2110, %v1748
        %v2112 = vadd.f32 %v2111, %v1750
        %v2113 = vadd.f32 %v2112, %v1752
        %v2114 = vadd.f32 %v2113, %v1754
        %v2115 = vadd.f32 %v2114, %v1756
        %v2116 = vadd.f32 %v2115, %v1758
        %v2117 = vadd.f32 %v2116, %v1760
        %v2118 = vadd.f32 %v2117, %v1762
        %v2119 = vadd.f32 %v2118, %v1764
        %v2120 = vadd.f32 %v2119, %v1766
        %v2121 = vadd.f32 %v2120, %v1768
        %v2122 = vadd.f32 %v2121, %v1770
        %v2123 = vadd.f32 %v2122, %v1772
        %v2124 = vadd.f32 %v2123, %v1774
        %v2125 = vadd.f32 %v2124, %v1776
        %v2126 = vadd.f32 %v2125, %v1778
        %v2127 = vadd.f32 %v2126, %v1780
        %v2128 = vadd.f32 %v2127, %v1782
        %v2129 = vadd.f32 %v2128, %v1784
        %v2130 = vadd.f32 %v2129, %v1786
        %v2131 = vadd.f32 %v2130, %v1788
        %v2132 = vadd.f32 %v2131, %v1790
        %v2133 = vadd.f32 %v2132, %v1792
        %v2134 = vadd.f32 %v2133, %v1794
        %v2135 = vadd.f32 %v2134, %v1796
        %v2136 = vadd.f32 %v2135, %v1798
        %v2137 = vadd.f32 %v2136, %v1800
        %v2138 = vadd.f32 %v2137, %v1802
        %v2139 = vadd.f32 %v2138, %v1804
        %v2140 = vadd.f32 %v2139, %v1806
        %v2141 = vadd.f32 %v2140, %v1808
        %v2142 = vadd.f32 %v2141, %v1810
        %v2143 = vadd.f32 %v2142, %v1812
        %v2144 = vadd.f32 %v2143, %v1814
        %v2145 = vadd.f32 %v2144, %v1816
        %v2146 = vadd.f32 %v2145, %v1818
        %v2147 = vadd.f32 %v2146, %v1820
        %v2148 = vadd.f32 %v2147, %v1822
        %v2149 = vadd.f32 %v2148, %v1824
        %v2150 = vadd.f32 %v2149, %v1826
        %v2151 = vadd.f32 %v2150, %v1828
        %v2152 = vadd.f32 %v2151, %v1830
        %v2153 = vadd.f32 %v2152, %v1832
        %v2154 = vadd.f32 %v2153, %v1834
        %v2155 = vadd.f32 %v2154, %v1836
        %v2156 = vadd.f32 %v2155, %v1838
        %v2157 = vadd.f32 %v2156, %v1840
        %v2158 = vadd.f32 %v2157, %v1842
        %v2159 = vadd.f32 %v2158, %v1844
        %v2160 = vadd.f32 %v2159, %v1846
        %v2161 = vadd.f32 %v2160, %v1848
        %v2162 = vadd.f32 %v2161, %v1850
        %v2163 = vadd.f32 %v2162, %v1852
        %v2164 = vadd.f32 %v2163, %v1854
        %v2165 = vadd.f32 %v2164, %v1856
        %v2166 = vadd.f32 %v2165, %v1858
        %v2167 = vadd.f32 %v2166, %v1860
        %v2168 = vadd.f32 %v2167, %v1862
        %v2169 = vadd.f32 %v2168, %v1864
        %v2170 = vadd.f32 %v2169, %v1866
        %v2171 = vadd.f32 %v2170, %v1868
        %v2172 = vadd.f32 %v2171, %v1870
        %v2173 = vadd.f32 %v2172, %v1872
        %v2174 = vadd.f32 %v2173, %v1874
        %v2175 = vadd.f32 %v2174, %v1876
        %v2176 = vadd.f32 %v2175, %v1878
        %v2177 = vadd.f32 %v2176, %v1880
        %v2178 = vadd.f32 %v2177, %v1882
        %v2179 = vadd.f32 %v2178, %v1884
        %v2180 = vadd.f32 %v2179, %v1886
        %v2181 = vadd.f32 %v2180, %v1888
        %v2182 = vadd.f32 %v2181, %v1890
        %v2183 = vadd.f32 %v2182, %v1892
        %v2184 = vadd.f32 %v2183, %v1894
        %v2185 = vadd.f32 %v2184, %v1896
        %v2186 = vadd.f32 %v2185, %v1898
        %v2187 = vadd.f32 %v2186, %v1900
        %v2188 = vadd.f32 %v2187, %v1902
        %v2189 = vadd.f32 %v2188, %v1904
        %v2190 = vadd.f32 %v2189, %v1906
        %v2191 = vadd.f32 %v2190, %v1908
        %v2192 = vadd.f32 %v2191, %v1910
        %v2193 = vadd.f32 %v2192, %v1912
        %v2194 = vadd.f32 %v2193, %v1914
        %v2195 = vadd.f32 %v2194, %v1916
        %v2196 = vadd.f32 %v2195, %v1918
        %v2197 = vadd.f32 %v2196, %v1920
        %v2198 = vadd.f32 %v2197, %v1922
        %v2199 = vadd.f32 %v2198, %v1924
        %v2200 = vadd.f32 %v2199, %v1926
        %v2201 = vadd.f32 %v2200, %v1928
        %v2202 = vadd.f32 %v2201, %v1930
        %v2203 = vadd.f32 %v2202, %v1932
        %v2204 = vadd.f32 %v2203, %v1934
        %v2205 = vadd.f32 %v2204, %v1936
        %v2206 = vadd.f32 %v2205, %v1938
        %v2207 = vadd.f32 %v2206, %v1940
        %v2208 = vadd.f32 %v2207, %v1942
        %v2209 = vadd.f32 %v2208, %v1944
        %v2210 = vadd.f32 %v2209, %v1946
        %v2211 = vadd.f32 %v2210, %v1948
        %v2212 = vadd.f32 %v2211, %v1950
        %v2213 = vadd.f32 %v2212, %v1952
        %v2214 = vadd.f32 %v2213, %v1954
        %v2215 = vadd.f32 %v2214, %v1956
        %v2216 = vadd.f32 %v2215, %v1958
        %v2217 = vadd.f32 %v2216, %v1960
        %v2218 = vadd.f32 %v2217, %v1962
        %v2219 = vadd.f32 %v1963, %v2218
        %2220 = vst [vmem:[%s155] sm:$0xff] %v2219
        %s2221 = sand.u32 %s66, 1
        %s2222 = scalar_lea.sflag [#allocation4], %s2221
        %s2223 = sand.u32 %s66, 1
        %s2224 = smul.addr %s2223, 8
        %s2225 = scalar_lea.vmem [#allocation5], %s2224
        // Predicated region
        $region33: #{tpu_custom_call.1} parent=23 // pred_check
          %p2226 = pneg %p76
        $region34: #{tpu_custom_call.1} parent=23 // pred_check_branch
          %2228 = sbr.rel (%p2226) target = $region36
        $region35: #{tpu_custom_call.1} parent=23 // pred_region
          %s2230 = ssub.s32 128, 128
          %2231 = vsyncadd %s2222, %s2230
          %s2232 = smul.addr %s22, 128
          %s2233 = scalar_lea.hbm %s1, %s2232
          %s2235 = sshll.u32 %s2225, 4
          %s2236 = int_to_ptr.vmem [resolvable:$true] %s2235
          %2238 = dma.vmem_to_hbm [thread:$0]  %s2236, 128, %s2233, %s2222
        $region36: #{tpu_custom_call.1} parent=23 // pred_fallthru
          _
      $region24: #{tpu_custom_call.1} parent=5 // pred_fallthru
        _
      %p2239 = scmp.le.s32.totalorder 2, %s13
      // Predicated region
      $region37: #{tpu_custom_call.1} parent=5 // pred_check
        %p2240 = pneg %p2239
      $region38: #{tpu_custom_call.1} parent=5 // pred_check_branch
        %2242 = sbr.rel (%p2240) target = $region40
      $region39: #{tpu_custom_call.1} parent=5 // pred_region
        %s2243 = ssub.s32 %s13, 2
        // Predicated region
        $region41: #{tpu_custom_call.1} parent=39 // pred_check
          %p2244 = pneg %p82
        $region42: #{tpu_custom_call.1} parent=39 // pred_check_branch
          %2246 = sbr.rel (%p2244) target = $region44
        $region43: #{tpu_custom_call.1} parent=39 // pred_region
          %s2247 = sand.u32 %s67, 1
          %s2248 = scalar_lea.sflag [#allocation4], %s2247
          %s2249 = sand.u32 %s67, 1
          %s2250 = smul.addr %s2249, 8
          %s2251 = scalar_lea.vmem [#allocation5], %s2250
          %2252 = dma.done %s2248, 128
        $region44: #{tpu_custom_call.1} parent=39 // pred_fallthru
          _
      $region40: #{tpu_custom_call.1} parent=5 // pred_fallthru
        _
    $region6: #{tpu_custom_call.1} parent=1 // loop_footer
      %s17 = sadd.s32 1, %s13
    $region7: #{tpu_custom_call.1} parent=1 // loop_footer_branch
      %12 = sbr.rel target = $region3
    $region8: #{tpu_custom_call.1} parent=1 // loop_exit
      _
    %2253 = vsyncpa [#allocation3], 1
    %s2254 = scalar_lea.sflag [#allocation3], 1
    %2255 = vsyncpa %s2254, 1
    %2256 = vsyncpa [#allocation4], 1
    %s2257 = scalar_lea.sflag [#allocation4], 1
    %2258 = vsyncpa %s2257, 1

</llo_original>
